<compile_context>
chip_gen: v7x
topology: tpu7x:2x2x1
jax: 0.10.0
libtpu: 0.0.40
codegen_flags: <defaults>
</compile_context>

<pallas_src>
import jax
import jax.numpy as jnp
from jax.experimental import pallas as pl
from jax.experimental.pallas import tpu as pltpu


# ----------------------------- Pallas kernel ------------------------------- #
def generator_kernel(
    ids_ref,      # ((L+2)*Bp, 1) int32  time-major, time/batch-padded ids (-1 = pad)
    w1e_ref,      # (3, Vp, H)           embedding-folded conv1 weights, per tap
    b1_ref,       # (1, H)
    w2_ref,       # (3, H, H)            conv2 weights, per tap (in, out)
    b2_ref,       # (1, H)
    h0_ref,       # (Bp, H)              initial GRU hidden (batch-padded)
    w_ih_ref,     # (H, 3H)              GRU input->hidden (transposed), gates [r,z,n]
    w_hh_ref,     # (H, 3H)              GRU hidden->hidden (transposed)
    b_ih_ref,     # (1, 3H)
    b_hh_ref,     # (1, 3H)
    w_out_ref,    # (H, Vp)              gru2out weight (transposed, zero-padded cols)
    b_out_ref,    # (1, Vp)              gru2out bias (padded cols = -1e30)
    out_ref,      # (L*Bp, Vp)           log-softmax output (time-major, lane-dense)
    h_out_ref,    # (Bp, H)              final hidden
    gi_scr,       # (L*Bp, 3H) f32 VMEM  hoisted input-gate preactivations
    hall_scr,     # (L*Bp, H)  f32 VMEM  per-step GRU hidden states
):
    Bp, H = h0_ref.shape
    LBp, Vp = out_ref.shape
    L = LBp // Bp
    n_rows = ids_ref.shape[0]            # (L+2)*Bp

    # ---------- lane-dense one-hot (pad ids == -1 -> all-zero rows) ---------- #
    ids = ids_ref[...]                                                    # ((L+2)*Bp, 1)
    iota_v = jax.lax.broadcasted_iota(jnp.int32, (n_rows, Vp), 1)
    onehot = jnp.where(iota_v == ids, 1.0, 0.0).astype(jnp.float32)       # ((L+2)*Bp, Vp)

    # ---------- conv1 (k=3, pad=1) + ReLU, embedding folded in ---------- #
    # c1[t] = relu(sum_k onehot[t-1+k] @ W1e_k + b1); all slices sublane-aligned.
    c1 = jnp.dot(onehot[0:LBp, :], w1e_ref[0], preferred_element_type=jnp.float32)
    c1 = c1 + jnp.dot(onehot[Bp:Bp + LBp, :], w1e_ref[1],
                      preferred_element_type=jnp.float32)
    c1 = c1 + jnp.dot(onehot[2 * Bp:2 * Bp + LBp, :], w1e_ref[2],
                      preferred_element_type=jnp.float32)
    c1 = jnp.maximum(c1 + b1_ref[...], 0.0)                               # (L*Bp, H)

    # ---------- conv2 (k=3, pad=1) + ReLU: shifted-slice accumulated matmuls ---------- #
    zrow = jnp.zeros((Bp, H), jnp.float32)
    c1_pad = jnp.concatenate([zrow, c1, zrow], axis=0)                    # sublane-axis only
    c2 = jnp.dot(c1_pad[0:LBp, :], w2_ref[0], preferred_element_type=jnp.float32)
    c2 = c2 + jnp.dot(c1_pad[Bp:Bp + LBp, :], w2_ref[1],
                      preferred_element_type=jnp.float32)
    c2 = c2 + jnp.dot(c1_pad[2 * Bp:2 * Bp + LBp, :], w2_ref[2],
                      preferred_element_type=jnp.float32)
    c2 = jnp.maximum(c2 + b2_ref[...], 0.0)                               # (L*Bp, H)

    # ---------- GRU: input-gate matmul hoisted, recurrence via fori_loop ---------- #
    gi_scr[...] = (jnp.dot(c2, w_ih_ref[...], preferred_element_type=jnp.float32)
                   + b_ih_ref[...])                                       # (L*Bp, 3H)
    w_hh = w_hh_ref[...]
    b_hh = b_hh_ref[...]

    def gru_step(t, h):
        off = pl.multiple_of(t * Bp, Bp)
        gi = gi_scr[pl.ds(off, Bp), :]                                    # (Bp, 3H)
        gh = jnp.dot(h, w_hh, preferred_element_type=jnp.float32) + b_hh  # serial path
        r = jax.nn.sigmoid(gi[:, 0:H] + gh[:, 0:H])
        z = jax.nn.sigmoid(gi[:, H:2 * H] + gh[:, H:2 * H])
        n = jnp.tanh(gi[:, 2 * H:3 * H] + r * gh[:, 2 * H:3 * H])
        h_new = (1.0 - z) * n + z * h                                     # (Bp, H)
        hall_scr[pl.ds(off, Bp), :] = h_new
        return h_new

    h_final = jax.lax.fori_loop(0, L, gru_step, h0_ref[...], unroll=True)
    h_out_ref[...] = h_final

    # ---------- output projection + log_softmax (lane-dense, hoisted) ---------- #
    logits = (jnp.dot(hall_scr[...], w_out_ref[...],
                      preferred_element_type=jnp.float32) + b_out_ref[...])  # (L*Bp, Vp)
    m = jnp.max(logits, axis=-1, keepdims=True)          # padded cols are -1e30 -> ignored
    lse = jnp.log(jnp.sum(jnp.exp(logits - m), axis=-1, keepdims=True)) + m
    out_ref[...] = logits - lse


def _full_spec(shape):
    nd = len(shape)
    return pl.BlockSpec(shape, lambda i: (0,) * nd)


# ------------------------------ wrapper ------------------------------------ #
def generator_forward(inp, hidden, p):
    """inp: (B, L) int32 token ids; hidden: (1, B, H) f32. Returns ((L*B, V), (1, B, H))."""
    B, L = inp.shape
    V, E = p["emb"].shape
    H = p["conv1_w"].shape[0]

    Bp = max(8, ((B + 7) // 8) * 8)          # pad batch to the 8-sublane width
    Vp = max(128, ((V + 127) // 128) * 128)  # lane-dense vocab padding

    # tiny int-only glue: batch-pad, time-major, conv time padding (-1 => zero one-hot row)
    ids = jnp.pad(inp.astype(jnp.int32), ((0, Bp - B), (0, 0)), constant_values=-1)   # (Bp, L)
    ids = jnp.pad(ids.T, ((1, 1), (0, 0)), constant_values=-1)                        # (L+2, Bp)
    ids = ids.reshape((L + 2) * Bp, 1)

    h0 = jnp.pad(hidden.reshape(B, H), ((0, Bp - B), (0, 0)))                         # (Bp, H)

    # embedding folded into conv1: W1e[k] = emb @ conv1_w[:, :, k].T  -> (V, H) per tap
    w1e = jnp.einsum("ve,hek->kvh", p["emb"], p["conv1_w"])                           # (3, V, H)
    w1e = jnp.pad(w1e, ((0, 0), (0, Vp - V), (0, 0)))                                 # (3, Vp, H)

    # conv2 per-tap (in, out) weights
    w2 = jnp.transpose(p["conv2_w"], (2, 1, 0))                                       # (3, H, H)

    b1 = p["conv1_b"].reshape(1, H)
    b2 = p["conv2_b"].reshape(1, H)
    w_ih = p["w_ih"].T                                                                # (H, 3H)
    w_hh = p["w_hh"].T                                                                # (H, 3H)
    b_ih = p["b_ih"].reshape(1, 3 * H)
    b_hh = p["b_hh"].reshape(1, 3 * H)
    # lane-dense output weights: zero columns, -1e30 bias on padded vocab columns
    w_out = jnp.pad(p["out_w"].T, ((0, 0), (0, Vp - V)))                              # (H, Vp)
    b_out = jnp.pad(p["out_b"], (0, Vp - V), constant_values=-1e30).reshape(1, Vp)

    args = (ids, w1e, b1, w2, b2, h0, w_ih, w_hh, b_ih, b_hh, w_out, b_out)

    out_pad, h_pad = pl.pallas_call(
        generator_kernel,
        out_shape=(
            jax.ShapeDtypeStruct((L * Bp, Vp), jnp.float32),
            jax.ShapeDtypeStruct((Bp, H), jnp.float32),
        ),
        grid=(1,),
        in_specs=[_full_spec(a.shape) for a in args],
        out_specs=(_full_spec((L * Bp, Vp)), _full_spec((Bp, H))),
        scratch_shapes=[
            pltpu.VMEM((L * Bp, 3 * H), jnp.float32),   # hoisted GRU input gates
            pltpu.VMEM((L * Bp, H), jnp.float32),       # per-step hidden states
        ],
        compiler_params=pltpu.CompilerParams(dimension_semantics=("arbitrary",)),
    )(*args)

    # drop batch/vocab padding; keep row layout = time-major (row = t*B + b), as in PyTorch
    out = out_pad.reshape(L, Bp, Vp)[:, :B, :V].reshape(L * B, V)
    return out, h_pad[:B][None]                                                       # (L*B, V), (1, B, H)


# --------------------- deterministic parameter init ------------------------ #
def init_params(key, vocab_size, embedding_dim, hidden_dim):
    ks = jax.random.split(key, 11)
    s = 0.1
    f32 = jnp.float32
    return {
        "emb":     jax.random.normal(ks[0], (vocab_size, embedding_dim), f32) * s,
        "conv1_w": jax.random.normal(ks[1], (hidden_dim, embedding_dim, 3), f32) * s,
        "conv1_b": jax.random.normal(ks[2], (hidden_dim,), f32) * s,
        "conv2_w": jax.random.normal(ks[3], (hidden_dim, hidden_dim, 3), f32) * s,
        "conv2_b": jax.random.normal(ks[4], (hidden_dim,), f32) * s,
        "w_ih":    jax.random.normal(ks[5], (3 * hidden_dim, hidden_dim), f32) * s,
        "w_hh":    jax.random.normal(ks[6], (3 * hidden_dim, hidden_dim), f32) * s,
        "b_ih":    jax.random.normal(ks[7], (3 * hidden_dim,), f32) * s,
        "b_hh":    jax.random.normal(ks[8], (3 * hidden_dim,), f32) * s,
        "out_w":   jax.random.normal(ks[9], (vocab_size, hidden_dim), f32) * s,
        "out_b":   jax.random.normal(ks[10], (vocab_size,), f32) * s,
    }


# ------------------------ pure-JAX reference (check) ------------------------ #
def reference_forward(inp, hidden, p):
    B, L = inp.shape
    H = p["conv1_w"].shape[0]

    emb = p["emb"][inp]                                    # (B, L, E)
    x = jnp.transpose(emb, (0, 2, 1))                      # (B, E, L)

    def conv1d(x, w, b):
        xp = jnp.pad(x, ((0, 0), (0, 0), (1, 1)))
        y = jnp.zeros((x.shape[0], w.shape[0], x.shape[2]), jnp.float32)
        for k in range(3):
            y = y + jnp.einsum("bcl,oc->bol", xp[:, :, k:k + x.shape[2]], w[:, :, k])
        return y + b[None, :, None]

    c1 = jax.nn.relu(conv1d(x, p["conv1_w"], p["conv1_b"]))
    c2 = jax.nn.relu(conv1d(c1, p["conv2_w"], p["conv2_b"]))
    seq = jnp.transpose(c2, (2, 0, 1))                     # (L, B, H)

    h = hidden[0]
    outs = []
    for t in range(L):
        x_t = seq[t]
        gi = x_t @ p["w_ih"].T + p["b_ih"]
        gh = h @ p["w_hh"].T + p["b_hh"]
        r = jax.nn.sigmoid(gi[:, :H] + gh[:, :H])
        z = jax.nn.sigmoid(gi[:, H:2 * H] + gh[:, H:2 * H])
        n = jnp.tanh(gi[:, 2 * H:] + r * gh[:, 2 * H:])
        h = (1.0 - z) * n + z * h
        outs.append(h)
    out = jnp.stack(outs, 0).reshape(L * B, H)
    logits = out @ p["out_w"].T + p["out_b"]
    return jax.nn.log_softmax(logits, axis=1), h[None]


if __name__ == "__main__":
    V, E, H = 22, 32, 32          # vocab_size, embedding_dim, hidden_dim
    B, L = 2, 8                   # batch, seq_len

    key = jax.random.PRNGKey(0)
    pkey, ikey = jax.random.split(key)
    params = init_params(pkey, V, E, H)

    inp = jax.random.randint(ikey, (B, L), 0, V, dtype=jnp.int32)
    hidden = jnp.zeros((1, B, H), jnp.float32)             # init_hidden

    out, h_fin = generator_forward(inp, hidden, params)
    out = jax.block_until_ready(out)
    h_fin = jax.block_until_ready(h_fin)

    ref_out, ref_h = reference_forward(inp, hidden, params)
    assert out.shape == (L * B, V) and h_fin.shape == (1, B, H)
    assert jnp.allclose(out, ref_out, atol=1e-4, rtol=1e-4)
    assert jnp.allclose(h_fin, ref_h, atol=1e-4, rtol=1e-4)

    print("KERNEL_OK")
</pallas_src>

<mosaic_0001>
module attributes {stable_mosaic.version = 11 : i64} {
  func.func @generator_kernel(%arg0: i32, %arg1: memref<80x1xi32, #tpu.memory_space<vmem>>, %arg2: memref<3x128x32xf32, #tpu.memory_space<vmem>>, %arg3: memref<1x32xf32, #tpu.memory_space<vmem>>, %arg4: memref<3x32x32xf32, #tpu.memory_space<vmem>>, %arg5: memref<1x32xf32, #tpu.memory_space<vmem>>, %arg6: memref<8x32xf32, #tpu.memory_space<vmem>>, %arg7: memref<32x96xf32, #tpu.memory_space<vmem>>, %arg8: memref<32x96xf32, #tpu.memory_space<vmem>>, %arg9: memref<1x96xf32, #tpu.memory_space<vmem>>, %arg10: memref<1x96xf32, #tpu.memory_space<vmem>>, %arg11: memref<32x128xf32, #tpu.memory_space<vmem>>, %arg12: memref<1x128xf32, #tpu.memory_space<vmem>>, %arg13: memref<64x128xf32, #tpu.memory_space<vmem>>, %arg14: memref<8x32xf32, #tpu.memory_space<vmem>>, %arg15: memref<64x96xf32, #tpu.memory_space<vmem>>, %arg16: memref<64x32xf32, #tpu.memory_space<vmem>>) attributes {dimension_semantics = [#tpu.dimension_semantics<arbitrary>], iteration_bounds = array<i64: 1>, scalar_prefetch = 0 : i64, scratch_operands = 2 : i64, tpu.core_type = #tpu.core_type<tc>, window_params = [{pipeline_mode = #tpu.pipeline_mode<synchronous>, transform_indices = @transform_0, window_bounds = array<i64: 80, 1>}, {pipeline_mode = #tpu.pipeline_mode<synchronous>, transform_indices = @transform_1, window_bounds = array<i64: 3, 128, 32>}, {pipeline_mode = #tpu.pipeline_mode<synchronous>, transform_indices = @transform_2, window_bounds = array<i64: 1, 32>}, {pipeline_mode = #tpu.pipeline_mode<synchronous>, transform_indices = @transform_3, window_bounds = array<i64: 3, 32, 32>}, {pipeline_mode = #tpu.pipeline_mode<synchronous>, transform_indices = @transform_4, window_bounds = array<i64: 1, 32>}, {pipeline_mode = #tpu.pipeline_mode<synchronous>, transform_indices = @transform_5, window_bounds = array<i64: 8, 32>}, {pipeline_mode = #tpu.pipeline_mode<synchronous>, transform_indices = @transform_6, window_bounds = array<i64: 32, 96>}, {pipeline_mode = #tpu.pipeline_mode<synchronous>, transform_indices = @transform_7, window_bounds = array<i64: 32, 96>}, {pipeline_mode = #tpu.pipeline_mode<synchronous>, transform_indices = @transform_8, window_bounds = array<i64: 1, 96>}, {pipeline_mode = #tpu.pipeline_mode<synchronous>, transform_indices = @transform_9, window_bounds = array<i64: 1, 96>}, {pipeline_mode = #tpu.pipeline_mode<synchronous>, transform_indices = @transform_10, window_bounds = array<i64: 32, 128>}, {pipeline_mode = #tpu.pipeline_mode<synchronous>, transform_indices = @transform_11, window_bounds = array<i64: 1, 128>}, {pipeline_mode = #tpu.pipeline_mode<synchronous>, transform_indices = @transform_12, window_bounds = array<i64: 64, 128>}, {pipeline_mode = #tpu.pipeline_mode<synchronous>, transform_indices = @transform_13, window_bounds = array<i64: 8, 32>}]} {
    %c0 = arith.constant 0 : index
    %c0_0 = arith.constant 0 : index
    %0 = vector.load %arg1[%c0, %c0_0] : memref<80x1xi32, #tpu.memory_space<vmem>>, vector<80x1xi32>
    %1 = tpu.iota {dimensions = array<i32: 1>} : vector<80x128xi32>
    %2 = vector.broadcast %0 : vector<80x1xi32> to vector<80x128xi32>
    %3 = arith.cmpi eq, %1, %2 : vector<80x128xi32>
    %cst = arith.constant 1.000000e+00 : f32
    %cst_1 = arith.constant 0.000000e+00 : f32
    %4 = vector.broadcast %cst : f32 to vector<80x128xf32>
    %5 = vector.broadcast %cst_1 : f32 to vector<80x128xf32>
    %6 = arith.select %3, %4, %5 : vector<80x128xi1>, vector<80x128xf32>
    %7 = vector.extract_strided_slice %6 {offsets = [0, 0], sizes = [64, 128], strides = [1, 1]} : vector<80x128xf32> to vector<64x128xf32>
    %c0_2 = arith.constant 0 : index
    %c0_3 = arith.constant 0 : index
    %c0_4 = arith.constant 0 : index
    %8 = vector.load %arg2[%c0_2, %c0_3, %c0_4] : memref<3x128x32xf32, #tpu.memory_space<vmem>>, vector<1x128x32xf32>
    %9 = vector.shape_cast %8 : vector<1x128x32xf32> to vector<128x32xf32>
    %cst_5 = arith.constant dense<0.000000e+00> : vector<64x32xf32>
    %10 = tpu.matmul %7, %9, %cst_5 {dimension_numbers = #tpu.dot_dimension_numbers<[1], [0], [0], [1], [0, 0, 1, 1], [], []>} : vector<64x128xf32>, vector<128x32xf32>, vector<64x32xf32> -> vector<64x32xf32>
    %11 = vector.extract_strided_slice %6 {offsets = [8, 0], sizes = [64, 128], strides = [1, 1]} : vector<80x128xf32> to vector<64x128xf32>
    %c1 = arith.constant 1 : index
    %c0_6 = arith.constant 0 : index
    %c0_7 = arith.constant 0 : index
    %12 = vector.load %arg2[%c1, %c0_6, %c0_7] : memref<3x128x32xf32, #tpu.memory_space<vmem>>, vector<1x128x32xf32>
    %13 = vector.shape_cast %12 : vector<1x128x32xf32> to vector<128x32xf32>
    %cst_8 = arith.constant dense<0.000000e+00> : vector<64x32xf32>
    %14 = tpu.matmul %11, %13, %cst_8 {dimension_numbers = #tpu.dot_dimension_numbers<[1], [0], [0], [1], [0, 0, 1, 1], [], []>} : vector<64x128xf32>, vector<128x32xf32>, vector<64x32xf32> -> vector<64x32xf32>
    %15 = arith.addf %10, %14 : vector<64x32xf32>
    %16 = vector.extract_strided_slice %6 {offsets = [16, 0], sizes = [64, 128], strides = [1, 1]} : vector<80x128xf32> to vector<64x128xf32>
    %c2 = arith.constant 2 : index
    %c0_9 = arith.constant 0 : index
    %c0_10 = arith.constant 0 : index
    %17 = vector.load %arg2[%c2, %c0_9, %c0_10] : memref<3x128x32xf32, #tpu.memory_space<vmem>>, vector<1x128x32xf32>
    %18 = vector.shape_cast %17 : vector<1x128x32xf32> to vector<128x32xf32>
    %cst_11 = arith.constant dense<0.000000e+00> : vector<64x32xf32>
    %19 = tpu.matmul %16, %18, %cst_11 {dimension_numbers = #tpu.dot_dimension_numbers<[1], [0], [0], [1], [0, 0, 1, 1], [], []>} : vector<64x128xf32>, vector<128x32xf32>, vector<64x32xf32> -> vector<64x32xf32>
    %20 = arith.addf %15, %19 : vector<64x32xf32>
    %c0_12 = arith.constant 0 : index
    %c0_13 = arith.constant 0 : index
    %21 = vector.load %arg3[%c0_12, %c0_13] : memref<1x32xf32, #tpu.memory_space<vmem>>, vector<1x32xf32>
    %22 = vector.broadcast %21 : vector<1x32xf32> to vector<64x32xf32>
    %23 = arith.addf %20, %22 : vector<64x32xf32>
    %cst_14 = arith.constant 0.000000e+00 : f32
    %24 = vector.broadcast %cst_14 : f32 to vector<64x32xf32>
    %25 = arith.maximumf %23, %24 : vector<64x32xf32>
    %cst_15 = arith.constant 0.000000e+00 : f32
    %26 = vector.broadcast %cst_15 : f32 to vector<8x32xf32>
    %27 = tpu.concatenate %26, %25, %26 in 0 : vector<8x32xf32>, vector<64x32xf32>, vector<8x32xf32> -> vector<80x32xf32>
    %28 = vector.extract_strided_slice %27 {offsets = [0, 0], sizes = [64, 32], strides = [1, 1]} : vector<80x32xf32> to vector<64x32xf32>
    %c0_16 = arith.constant 0 : index
    %c0_17 = arith.constant 0 : index
    %c0_18 = arith.constant 0 : index
    %29 = vector.load %arg4[%c0_16, %c0_17, %c0_18] : memref<3x32x32xf32, #tpu.memory_space<vmem>>, vector<1x32x32xf32>
    %30 = vector.shape_cast %29 : vector<1x32x32xf32> to vector<32x32xf32>
    %cst_19 = arith.constant dense<0.000000e+00> : vector<64x32xf32>
    %31 = tpu.matmul %28, %30, %cst_19 {dimension_numbers = #tpu.dot_dimension_numbers<[1], [0], [0], [1], [0, 0, 1, 1], [], []>} : vector<64x32xf32>, vector<32x32xf32>, vector<64x32xf32> -> vector<64x32xf32>
    %32 = vector.extract_strided_slice %27 {offsets = [8, 0], sizes = [64, 32], strides = [1, 1]} : vector<80x32xf32> to vector<64x32xf32>
    %c1_20 = arith.constant 1 : index
    %c0_21 = arith.constant 0 : index
    %c0_22 = arith.constant 0 : index
    %33 = vector.load %arg4[%c1_20, %c0_21, %c0_22] : memref<3x32x32xf32, #tpu.memory_space<vmem>>, vector<1x32x32xf32>
    %34 = vector.shape_cast %33 : vector<1x32x32xf32> to vector<32x32xf32>
    %cst_23 = arith.constant dense<0.000000e+00> : vector<64x32xf32>
    %35 = tpu.matmul %32, %34, %cst_23 {dimension_numbers = #tpu.dot_dimension_numbers<[1], [0], [0], [1], [0, 0, 1, 1], [], []>} : vector<64x32xf32>, vector<32x32xf32>, vector<64x32xf32> -> vector<64x32xf32>
    %36 = arith.addf %31, %35 : vector<64x32xf32>
    %37 = vector.extract_strided_slice %27 {offsets = [16, 0], sizes = [64, 32], strides = [1, 1]} : vector<80x32xf32> to vector<64x32xf32>
    %c2_24 = arith.constant 2 : index
    %c0_25 = arith.constant 0 : index
    %c0_26 = arith.constant 0 : index
    %38 = vector.load %arg4[%c2_24, %c0_25, %c0_26] : memref<3x32x32xf32, #tpu.memory_space<vmem>>, vector<1x32x32xf32>
    %39 = vector.shape_cast %38 : vector<1x32x32xf32> to vector<32x32xf32>
    %cst_27 = arith.constant dense<0.000000e+00> : vector<64x32xf32>
    %40 = tpu.matmul %37, %39, %cst_27 {dimension_numbers = #tpu.dot_dimension_numbers<[1], [0], [0], [1], [0, 0, 1, 1], [], []>} : vector<64x32xf32>, vector<32x32xf32>, vector<64x32xf32> -> vector<64x32xf32>
    %41 = arith.addf %36, %40 : vector<64x32xf32>
    %c0_28 = arith.constant 0 : index
    %c0_29 = arith.constant 0 : index
    %42 = vector.load %arg5[%c0_28, %c0_29] : memref<1x32xf32, #tpu.memory_space<vmem>>, vector<1x32xf32>
    %43 = vector.broadcast %42 : vector<1x32xf32> to vector<64x32xf32>
    %44 = arith.addf %41, %43 : vector<64x32xf32>
    %cst_30 = arith.constant 0.000000e+00 : f32
    %45 = vector.broadcast %cst_30 : f32 to vector<64x32xf32>
    %46 = arith.maximumf %44, %45 : vector<64x32xf32>
    %c0_31 = arith.constant 0 : index
    %c0_32 = arith.constant 0 : index
    %47 = vector.load %arg7[%c0_31, %c0_32] : memref<32x96xf32, #tpu.memory_space<vmem>>, vector<32x96xf32>
    %cst_33 = arith.constant dense<0.000000e+00> : vector<64x96xf32>
    %48 = tpu.matmul %46, %47, %cst_33 {dimension_numbers = #tpu.dot_dimension_numbers<[1], [0], [0], [1], [0, 0, 1, 1], [], []>} : vector<64x32xf32>, vector<32x96xf32>, vector<64x96xf32> -> vector<64x96xf32>
    %c0_34 = arith.constant 0 : index
    %c0_35 = arith.constant 0 : index
    %49 = vector.load %arg9[%c0_34, %c0_35] : memref<1x96xf32, #tpu.memory_space<vmem>>, vector<1x96xf32>
    %50 = vector.broadcast %49 : vector<1x96xf32> to vector<64x96xf32>
    %51 = arith.addf %48, %50 : vector<64x96xf32>
    %c0_36 = arith.constant 0 : index
    %c0_37 = arith.constant 0 : index
    %52 = vector.load %arg15[%c0_36, %c0_37] : memref<64x96xf32, #tpu.memory_space<vmem>>, vector<64x96xf32>
    tpu.vector_store %arg15[%c0_36, %c0_37], %51 {strides = array<i32>} : memref<64x96xf32, #tpu.memory_space<vmem>>, vector<64x96xf32>,
    %c0_38 = arith.constant 0 : index
    %c0_39 = arith.constant 0 : index
    %53 = vector.load %arg8[%c0_38, %c0_39] : memref<32x96xf32, #tpu.memory_space<vmem>>, vector<32x96xf32>
    %c0_40 = arith.constant 0 : index
    %c0_41 = arith.constant 0 : index
    %54 = vector.load %arg10[%c0_40, %c0_41] : memref<1x96xf32, #tpu.memory_space<vmem>>, vector<1x96xf32>
    %c0_42 = arith.constant 0 : index
    %c0_43 = arith.constant 0 : index
    %55 = vector.load %arg6[%c0_42, %c0_43] : memref<8x32xf32, #tpu.memory_space<vmem>>, vector<8x32xf32>
    %c0_i32 = arith.constant 0 : i32
    %c8_i32 = arith.constant 8 : i32
    %56 = arith.muli %c0_i32, %c8_i32 : i32
    %57 = tpu.assume_multiple %56, 8 : i32
    %58 = arith.index_cast %57 : i32 to index
    %c0_44 = arith.constant 0 : index
    %59 = vector.load %arg15[%58, %c0_44] : memref<64x96xf32, #tpu.memory_space<vmem>>, vector<8x96xf32>
    %cst_45 = arith.constant dense<0.000000e+00> : vector<8x96xf32>
    %60 = tpu.matmul %55, %53, %cst_45 {dimension_numbers = #tpu.dot_dimension_numbers<[1], [0], [0], [1], [0, 0, 1, 1], [], []>} : vector<8x32xf32>, vector<32x96xf32>, vector<8x96xf32> -> vector<8x96xf32>
    %61 = vector.broadcast %54 : vector<1x96xf32> to vector<8x96xf32>
    %62 = arith.addf %60, %61 : vector<8x96xf32>
    %63 = vector.extract_strided_slice %59 {offsets = [0, 0], sizes = [8, 32], strides = [1, 1]} : vector<8x96xf32> to vector<8x32xf32>
    %64 = vector.extract_strided_slice %62 {offsets = [0, 0], sizes = [8, 32], strides = [1, 1]} : vector<8x96xf32> to vector<8x32xf32>
    %65 = arith.addf %63, %64 : vector<8x32xf32>
    %66 = arith.negf %65 : vector<8x32xf32>
    %67 = math.exp %66 : vector<8x32xf32>
    %cst_46 = arith.constant 1.000000e+00 : f32
    %68 = vector.broadcast %cst_46 : f32 to vector<8x32xf32>
    %69 = arith.addf %68, %67 : vector<8x32xf32>
    %70 = arith.divf %68, %69 : vector<8x32xf32>
    %71 = vector.extract_strided_slice %59 {offsets = [0, 32], sizes = [8, 32], strides = [1, 1]} : vector<8x96xf32> to vector<8x32xf32>
    %72 = vector.extract_strided_slice %62 {offsets = [0, 32], sizes = [8, 32], strides = [1, 1]} : vector<8x96xf32> to vector<8x32xf32>
    %73 = arith.addf %71, %72 : vector<8x32xf32>
    %74 = arith.negf %73 : vector<8x32xf32>
    %75 = math.exp %74 : vector<8x32xf32>
    %cst_47 = arith.constant 1.000000e+00 : f32
    %76 = vector.broadcast %cst_47 : f32 to vector<8x32xf32>
    %77 = arith.addf %76, %75 : vector<8x32xf32>
    %78 = arith.divf %76, %77 : vector<8x32xf32>
    %79 = vector.extract_strided_slice %59 {offsets = [0, 64], sizes = [8, 32], strides = [1, 1]} : vector<8x96xf32> to vector<8x32xf32>
    %80 = vector.extract_strided_slice %62 {offsets = [0, 64], sizes = [8, 32], strides = [1, 1]} : vector<8x96xf32> to vector<8x32xf32>
    %81 = arith.mulf %70, %80 : vector<8x32xf32>
    %82 = arith.addf %79, %81 : vector<8x32xf32>
    %83 = math.tanh %82 : vector<8x32xf32>
    %cst_48 = arith.constant 1.000000e+00 : f32
    %84 = vector.broadcast %cst_48 : f32 to vector<8x32xf32>
    %85 = arith.subf %84, %78 : vector<8x32xf32>
    %86 = arith.mulf %85, %83 : vector<8x32xf32>
    %87 = arith.mulf %78, %55 : vector<8x32xf32>
    %88 = arith.addf %86, %87 : vector<8x32xf32>
    %89 = arith.index_cast %57 : i32 to index
    %c0_49 = arith.constant 0 : index
    %90 = vector.load %arg16[%89, %c0_49] : memref<64x32xf32, #tpu.memory_space<vmem>>, vector<8x32xf32>
    tpu.vector_store %arg16[%89, %c0_49], %88 {strides = array<i32>} : memref<64x32xf32, #tpu.memory_space<vmem>>, vector<8x32xf32>,
    %c1_i32 = arith.constant 1 : i32
    %c8_i32_50 = arith.constant 8 : i32
    %91 = arith.muli %c1_i32, %c8_i32_50 : i32
    %92 = tpu.assume_multiple %91, 8 : i32
    %93 = arith.index_cast %92 : i32 to index
    %c0_51 = arith.constant 0 : index
    %94 = vector.load %arg15[%93, %c0_51] : memref<64x96xf32, #tpu.memory_space<vmem>>, vector<8x96xf32>
    %cst_52 = arith.constant dense<0.000000e+00> : vector<8x96xf32>
    %95 = tpu.matmul %88, %53, %cst_52 {dimension_numbers = #tpu.dot_dimension_numbers<[1], [0], [0], [1], [0, 0, 1, 1], [], []>} : vector<8x32xf32>, vector<32x96xf32>, vector<8x96xf32> -> vector<8x96xf32>
    %96 = vector.broadcast %54 : vector<1x96xf32> to vector<8x96xf32>
    %97 = arith.addf %95, %96 : vector<8x96xf32>
    %98 = vector.extract_strided_slice %94 {offsets = [0, 0], sizes = [8, 32], strides = [1, 1]} : vector<8x96xf32> to vector<8x32xf32>
    %99 = vector.extract_strided_slice %97 {offsets = [0, 0], sizes = [8, 32], strides = [1, 1]} : vector<8x96xf32> to vector<8x32xf32>
    %100 = arith.addf %98, %99 : vector<8x32xf32>
    %101 = arith.negf %100 : vector<8x32xf32>
    %102 = math.exp %101 : vector<8x32xf32>
    %cst_53 = arith.constant 1.000000e+00 : f32
    %103 = vector.broadcast %cst_53 : f32 to vector<8x32xf32>
    %104 = arith.addf %103, %102 : vector<8x32xf32>
    %105 = arith.divf %103, %104 : vector<8x32xf32>
    %106 = vector.extract_strided_slice %94 {offsets = [0, 32], sizes = [8, 32], strides = [1, 1]} : vector<8x96xf32> to vector<8x32xf32>
    %107 = vector.extract_strided_slice %97 {offsets = [0, 32], sizes = [8, 32], strides = [1, 1]} : vector<8x96xf32> to vector<8x32xf32>
    %108 = arith.addf %106, %107 : vector<8x32xf32>
    %109 = arith.negf %108 : vector<8x32xf32>
    %110 = math.exp %109 : vector<8x32xf32>
    %cst_54 = arith.constant 1.000000e+00 : f32
    %111 = vector.broadcast %cst_54 : f32 to vector<8x32xf32>
    %112 = arith.addf %111, %110 : vector<8x32xf32>
    %113 = arith.divf %111, %112 : vector<8x32xf32>
    %114 = vector.extract_strided_slice %94 {offsets = [0, 64], sizes = [8, 32], strides = [1, 1]} : vector<8x96xf32> to vector<8x32xf32>
    %115 = vector.extract_strided_slice %97 {offsets = [0, 64], sizes = [8, 32], strides = [1, 1]} : vector<8x96xf32> to vector<8x32xf32>
    %116 = arith.mulf %105, %115 : vector<8x32xf32>
    %117 = arith.addf %114, %116 : vector<8x32xf32>
    %118 = math.tanh %117 : vector<8x32xf32>
    %cst_55 = arith.constant 1.000000e+00 : f32
    %119 = vector.broadcast %cst_55 : f32 to vector<8x32xf32>
    %120 = arith.subf %119, %113 : vector<8x32xf32>
    %121 = arith.mulf %120, %118 : vector<8x32xf32>
    %122 = arith.mulf %113, %88 : vector<8x32xf32>
    %123 = arith.addf %121, %122 : vector<8x32xf32>
    %124 = arith.index_cast %92 : i32 to index
    %c0_56 = arith.constant 0 : index
    %125 = vector.load %arg16[%124, %c0_56] : memref<64x32xf32, #tpu.memory_space<vmem>>, vector<8x32xf32>
    tpu.vector_store %arg16[%124, %c0_56], %123 {strides = array<i32>} : memref<64x32xf32, #tpu.memory_space<vmem>>, vector<8x32xf32>,
    %c2_i32 = arith.constant 2 : i32
    %c8_i32_57 = arith.constant 8 : i32
    %126 = arith.muli %c2_i32, %c8_i32_57 : i32
    %127 = tpu.assume_multiple %126, 8 : i32
    %128 = arith.index_cast %127 : i32 to index
    %c0_58 = arith.constant 0 : index
    %129 = vector.load %arg15[%128, %c0_58] : memref<64x96xf32, #tpu.memory_space<vmem>>, vector<8x96xf32>
    %cst_59 = arith.constant dense<0.000000e+00> : vector<8x96xf32>
    %130 = tpu.matmul %123, %53, %cst_59 {dimension_numbers = #tpu.dot_dimension_numbers<[1], [0], [0], [1], [0, 0, 1, 1], [], []>} : vector<8x32xf32>, vector<32x96xf32>, vector<8x96xf32> -> vector<8x96xf32>
    %131 = vector.broadcast %54 : vector<1x96xf32> to vector<8x96xf32>
    %132 = arith.addf %130, %131 : vector<8x96xf32>
    %133 = vector.extract_strided_slice %129 {offsets = [0, 0], sizes = [8, 32], strides = [1, 1]} : vector<8x96xf32> to vector<8x32xf32>
    %134 = vector.extract_strided_slice %132 {offsets = [0, 0], sizes = [8, 32], strides = [1, 1]} : vector<8x96xf32> to vector<8x32xf32>
    %135 = arith.addf %133, %134 : vector<8x32xf32>
    %136 = arith.negf %135 : vector<8x32xf32>
    %137 = math.exp %136 : vector<8x32xf32>
    %cst_60 = arith.constant 1.000000e+00 : f32
    %138 = vector.broadcast %cst_60 : f32 to vector<8x32xf32>
    %139 = arith.addf %138, %137 : vector<8x32xf32>
    %140 = arith.divf %138, %139 : vector<8x32xf32>
    %141 = vector.extract_strided_slice %129 {offsets = [0, 32], sizes = [8, 32], strides = [1, 1]} : vector<8x96xf32> to vector<8x32xf32>
    %142 = vector.extract_strided_slice %132 {offsets = [0, 32], sizes = [8, 32], strides = [1, 1]} : vector<8x96xf32> to vector<8x32xf32>
    %143 = arith.addf %141, %142 : vector<8x32xf32>
    %144 = arith.negf %143 : vector<8x32xf32>
    %145 = math.exp %144 : vector<8x32xf32>
    %cst_61 = arith.constant 1.000000e+00 : f32
    %146 = vector.broadcast %cst_61 : f32 to vector<8x32xf32>
    %147 = arith.addf %146, %145 : vector<8x32xf32>
    %148 = arith.divf %146, %147 : vector<8x32xf32>
    %149 = vector.extract_strided_slice %129 {offsets = [0, 64], sizes = [8, 32], strides = [1, 1]} : vector<8x96xf32> to vector<8x32xf32>
    %150 = vector.extract_strided_slice %132 {offsets = [0, 64], sizes = [8, 32], strides = [1, 1]} : vector<8x96xf32> to vector<8x32xf32>
    %151 = arith.mulf %140, %150 : vector<8x32xf32>
    %152 = arith.addf %149, %151 : vector<8x32xf32>
    %153 = math.tanh %152 : vector<8x32xf32>
    %cst_62 = arith.constant 1.000000e+00 : f32
    %154 = vector.broadcast %cst_62 : f32 to vector<8x32xf32>
    %155 = arith.subf %154, %148 : vector<8x32xf32>
    %156 = arith.mulf %155, %153 : vector<8x32xf32>
    %157 = arith.mulf %148, %123 : vector<8x32xf32>
    %158 = arith.addf %156, %157 : vector<8x32xf32>
    %159 = arith.index_cast %127 : i32 to index
    %c0_63 = arith.constant 0 : index
    %160 = vector.load %arg16[%159, %c0_63] : memref<64x32xf32, #tpu.memory_space<vmem>>, vector<8x32xf32>
    tpu.vector_store %arg16[%159, %c0_63], %158 {strides = array<i32>} : memref<64x32xf32, #tpu.memory_space<vmem>>, vector<8x32xf32>,
    %c3_i32 = arith.constant 3 : i32
    %c8_i32_64 = arith.constant 8 : i32
    %161 = arith.muli %c3_i32, %c8_i32_64 : i32
    %162 = tpu.assume_multiple %161, 8 : i32
    %163 = arith.index_cast %162 : i32 to index
    %c0_65 = arith.constant 0 : index
    %164 = vector.load %arg15[%163, %c0_65] : memref<64x96xf32, #tpu.memory_space<vmem>>, vector<8x96xf32>
    %cst_66 = arith.constant dense<0.000000e+00> : vector<8x96xf32>
    %165 = tpu.matmul %158, %53, %cst_66 {dimension_numbers = #tpu.dot_dimension_numbers<[1], [0], [0], [1], [0, 0, 1, 1], [], []>} : vector<8x32xf32>, vector<32x96xf32>, vector<8x96xf32> -> vector<8x96xf32>
    %166 = vector.broadcast %54 : vector<1x96xf32> to vector<8x96xf32>
    %167 = arith.addf %165, %166 : vector<8x96xf32>
    %168 = vector.extract_strided_slice %164 {offsets = [0, 0], sizes = [8, 32], strides = [1, 1]} : vector<8x96xf32> to vector<8x32xf32>
    %169 = vector.extract_strided_slice %167 {offsets = [0, 0], sizes = [8, 32], strides = [1, 1]} : vector<8x96xf32> to vector<8x32xf32>
    %170 = arith.addf %168, %169 : vector<8x32xf32>
    %171 = arith.negf %170 : vector<8x32xf32>
    %172 = math.exp %171 : vector<8x32xf32>
    %cst_67 = arith.constant 1.000000e+00 : f32
    %173 = vector.broadcast %cst_67 : f32 to vector<8x32xf32>
    %174 = arith.addf %173, %172 : vector<8x32xf32>
    %175 = arith.divf %173, %174 : vector<8x32xf32>
    %176 = vector.extract_strided_slice %164 {offsets = [0, 32], sizes = [8, 32], strides = [1, 1]} : vector<8x96xf32> to vector<8x32xf32>
    %177 = vector.extract_strided_slice %167 {offsets = [0, 32], sizes = [8, 32], strides = [1, 1]} : vector<8x96xf32> to vector<8x32xf32>
    %178 = arith.addf %176, %177 : vector<8x32xf32>
    %179 = arith.negf %178 : vector<8x32xf32>
    %180 = math.exp %179 : vector<8x32xf32>
    %cst_68 = arith.constant 1.000000e+00 : f32
    %181 = vector.broadcast %cst_68 : f32 to vector<8x32xf32>
    %182 = arith.addf %181, %180 : vector<8x32xf32>
    %183 = arith.divf %181, %182 : vector<8x32xf32>
    %184 = vector.extract_strided_slice %164 {offsets = [0, 64], sizes = [8, 32], strides = [1, 1]} : vector<8x96xf32> to vector<8x32xf32>
    %185 = vector.extract_strided_slice %167 {offsets = [0, 64], sizes = [8, 32], strides = [1, 1]} : vector<8x96xf32> to vector<8x32xf32>
    %186 = arith.mulf %175, %185 : vector<8x32xf32>
    %187 = arith.addf %184, %186 : vector<8x32xf32>
    %188 = math.tanh %187 : vector<8x32xf32>
    %cst_69 = arith.constant 1.000000e+00 : f32
    %189 = vector.broadcast %cst_69 : f32 to vector<8x32xf32>
    %190 = arith.subf %189, %183 : vector<8x32xf32>
    %191 = arith.mulf %190, %188 : vector<8x32xf32>
    %192 = arith.mulf %183, %158 : vector<8x32xf32>
    %193 = arith.addf %191, %192 : vector<8x32xf32>
    %194 = arith.index_cast %162 : i32 to index
    %c0_70 = arith.constant 0 : index
    %195 = vector.load %arg16[%194, %c0_70] : memref<64x32xf32, #tpu.memory_space<vmem>>, vector<8x32xf32>
    tpu.vector_store %arg16[%194, %c0_70], %193 {strides = array<i32>} : memref<64x32xf32, #tpu.memory_space<vmem>>, vector<8x32xf32>,
    %c4_i32 = arith.constant 4 : i32
    %c8_i32_71 = arith.constant 8 : i32
    %196 = arith.muli %c4_i32, %c8_i32_71 : i32
    %197 = tpu.assume_multiple %196, 8 : i32
    %198 = arith.index_cast %197 : i32 to index
    %c0_72 = arith.constant 0 : index
    %199 = vector.load %arg15[%198, %c0_72] : memref<64x96xf32, #tpu.memory_space<vmem>>, vector<8x96xf32>
    %cst_73 = arith.constant dense<0.000000e+00> : vector<8x96xf32>
    %200 = tpu.matmul %193, %53, %cst_73 {dimension_numbers = #tpu.dot_dimension_numbers<[1], [0], [0], [1], [0, 0, 1, 1], [], []>} : vector<8x32xf32>, vector<32x96xf32>, vector<8x96xf32> -> vector<8x96xf32>
    %201 = vector.broadcast %54 : vector<1x96xf32> to vector<8x96xf32>
    %202 = arith.addf %200, %201 : vector<8x96xf32>
    %203 = vector.extract_strided_slice %199 {offsets = [0, 0], sizes = [8, 32], strides = [1, 1]} : vector<8x96xf32> to vector<8x32xf32>
    %204 = vector.extract_strided_slice %202 {offsets = [0, 0], sizes = [8, 32], strides = [1, 1]} : vector<8x96xf32> to vector<8x32xf32>
    %205 = arith.addf %203, %204 : vector<8x32xf32>
    %206 = arith.negf %205 : vector<8x32xf32>
    %207 = math.exp %206 : vector<8x32xf32>
    %cst_74 = arith.constant 1.000000e+00 : f32
    %208 = vector.broadcast %cst_74 : f32 to vector<8x32xf32>
    %209 = arith.addf %208, %207 : vector<8x32xf32>
    %210 = arith.divf %208, %209 : vector<8x32xf32>
    %211 = vector.extract_strided_slice %199 {offsets = [0, 32], sizes = [8, 32], strides = [1, 1]} : vector<8x96xf32> to vector<8x32xf32>
    %212 = vector.extract_strided_slice %202 {offsets = [0, 32], sizes = [8, 32], strides = [1, 1]} : vector<8x96xf32> to vector<8x32xf32>
    %213 = arith.addf %211, %212 : vector<8x32xf32>
    %214 = arith.negf %213 : vector<8x32xf32>
    %215 = math.exp %214 : vector<8x32xf32>
    %cst_75 = arith.constant 1.000000e+00 : f32
    %216 = vector.broadcast %cst_75 : f32 to vector<8x32xf32>
    %217 = arith.addf %216, %215 : vector<8x32xf32>
    %218 = arith.divf %216, %217 : vector<8x32xf32>
    %219 = vector.extract_strided_slice %199 {offsets = [0, 64], sizes = [8, 32], strides = [1, 1]} : vector<8x96xf32> to vector<8x32xf32>
    %220 = vector.extract_strided_slice %202 {offsets = [0, 64], sizes = [8, 32], strides = [1, 1]} : vector<8x96xf32> to vector<8x32xf32>
    %221 = arith.mulf %210, %220 : vector<8x32xf32>
    %222 = arith.addf %219, %221 : vector<8x32xf32>
    %223 = math.tanh %222 : vector<8x32xf32>
    %cst_76 = arith.constant 1.000000e+00 : f32
    %224 = vector.broadcast %cst_76 : f32 to vector<8x32xf32>
    %225 = arith.subf %224, %218 : vector<8x32xf32>
    %226 = arith.mulf %225, %223 : vector<8x32xf32>
    %227 = arith.mulf %218, %193 : vector<8x32xf32>
    %228 = arith.addf %226, %227 : vector<8x32xf32>
    %229 = arith.index_cast %197 : i32 to index
    %c0_77 = arith.constant 0 : index
    %230 = vector.load %arg16[%229, %c0_77] : memref<64x32xf32, #tpu.memory_space<vmem>>, vector<8x32xf32>
    tpu.vector_store %arg16[%229, %c0_77], %228 {strides = array<i32>} : memref<64x32xf32, #tpu.memory_space<vmem>>, vector<8x32xf32>,
    %c5_i32 = arith.constant 5 : i32
    %c8_i32_78 = arith.constant 8 : i32
    %231 = arith.muli %c5_i32, %c8_i32_78 : i32
    %232 = tpu.assume_multiple %231, 8 : i32
    %233 = arith.index_cast %232 : i32 to index
    %c0_79 = arith.constant 0 : index
    %234 = vector.load %arg15[%233, %c0_79] : memref<64x96xf32, #tpu.memory_space<vmem>>, vector<8x96xf32>
    %cst_80 = arith.constant dense<0.000000e+00> : vector<8x96xf32>
    %235 = tpu.matmul %228, %53, %cst_80 {dimension_numbers = #tpu.dot_dimension_numbers<[1], [0], [0], [1], [0, 0, 1, 1], [], []>} : vector<8x32xf32>, vector<32x96xf32>, vector<8x96xf32> -> vector<8x96xf32>
    %236 = vector.broadcast %54 : vector<1x96xf32> to vector<8x96xf32>
    %237 = arith.addf %235, %236 : vector<8x96xf32>
    %238 = vector.extract_strided_slice %234 {offsets = [0, 0], sizes = [8, 32], strides = [1, 1]} : vector<8x96xf32> to vector<8x32xf32>
    %239 = vector.extract_strided_slice %237 {offsets = [0, 0], sizes = [8, 32], strides = [1, 1]} : vector<8x96xf32> to vector<8x32xf32>
    %240 = arith.addf %238, %239 : vector<8x32xf32>
    %241 = arith.negf %240 : vector<8x32xf32>
    %242 = math.exp %241 : vector<8x32xf32>
    %cst_81 = arith.constant 1.000000e+00 : f32
    %243 = vector.broadcast %cst_81 : f32 to vector<8x32xf32>
    %244 = arith.addf %243, %242 : vector<8x32xf32>
    %245 = arith.divf %243, %244 : vector<8x32xf32>
    %246 = vector.extract_strided_slice %234 {offsets = [0, 32], sizes = [8, 32], strides = [1, 1]} : vector<8x96xf32> to vector<8x32xf32>
    %247 = vector.extract_strided_slice %237 {offsets = [0, 32], sizes = [8, 32], strides = [1, 1]} : vector<8x96xf32> to vector<8x32xf32>
    %248 = arith.addf %246, %247 : vector<8x32xf32>
    %249 = arith.negf %248 : vector<8x32xf32>
    %250 = math.exp %249 : vector<8x32xf32>
    %cst_82 = arith.constant 1.000000e+00 : f32
    %251 = vector.broadcast %cst_82 : f32 to vector<8x32xf32>
    %252 = arith.addf %251, %250 : vector<8x32xf32>
    %253 = arith.divf %251, %252 : vector<8x32xf32>
    %254 = vector.extract_strided_slice %234 {offsets = [0, 64], sizes = [8, 32], strides = [1, 1]} : vector<8x96xf32> to vector<8x32xf32>
    %255 = vector.extract_strided_slice %237 {offsets = [0, 64], sizes = [8, 32], strides = [1, 1]} : vector<8x96xf32> to vector<8x32xf32>
    %256 = arith.mulf %245, %255 : vector<8x32xf32>
    %257 = arith.addf %254, %256 : vector<8x32xf32>
    %258 = math.tanh %257 : vector<8x32xf32>
    %cst_83 = arith.constant 1.000000e+00 : f32
    %259 = vector.broadcast %cst_83 : f32 to vector<8x32xf32>
    %260 = arith.subf %259, %253 : vector<8x32xf32>
    %261 = arith.mulf %260, %258 : vector<8x32xf32>
    %262 = arith.mulf %253, %228 : vector<8x32xf32>
    %263 = arith.addf %261, %262 : vector<8x32xf32>
    %264 = arith.index_cast %232 : i32 to index
    %c0_84 = arith.constant 0 : index
    %265 = vector.load %arg16[%264, %c0_84] : memref<64x32xf32, #tpu.memory_space<vmem>>, vector<8x32xf32>
    tpu.vector_store %arg16[%264, %c0_84], %263 {strides = array<i32>} : memref<64x32xf32, #tpu.memory_space<vmem>>, vector<8x32xf32>,
    %c6_i32 = arith.constant 6 : i32
    %c8_i32_85 = arith.constant 8 : i32
    %266 = arith.muli %c6_i32, %c8_i32_85 : i32
    %267 = tpu.assume_multiple %266, 8 : i32
    %268 = arith.index_cast %267 : i32 to index
    %c0_86 = arith.constant 0 : index
    %269 = vector.load %arg15[%268, %c0_86] : memref<64x96xf32, #tpu.memory_space<vmem>>, vector<8x96xf32>
    %cst_87 = arith.constant dense<0.000000e+00> : vector<8x96xf32>
    %270 = tpu.matmul %263, %53, %cst_87 {dimension_numbers = #tpu.dot_dimension_numbers<[1], [0], [0], [1], [0, 0, 1, 1], [], []>} : vector<8x32xf32>, vector<32x96xf32>, vector<8x96xf32> -> vector<8x96xf32>
    %271 = vector.broadcast %54 : vector<1x96xf32> to vector<8x96xf32>
    %272 = arith.addf %270, %271 : vector<8x96xf32>
    %273 = vector.extract_strided_slice %269 {offsets = [0, 0], sizes = [8, 32], strides = [1, 1]} : vector<8x96xf32> to vector<8x32xf32>
    %274 = vector.extract_strided_slice %272 {offsets = [0, 0], sizes = [8, 32], strides = [1, 1]} : vector<8x96xf32> to vector<8x32xf32>
    %275 = arith.addf %273, %274 : vector<8x32xf32>
    %276 = arith.negf %275 : vector<8x32xf32>
    %277 = math.exp %276 : vector<8x32xf32>
    %cst_88 = arith.constant 1.000000e+00 : f32
    %278 = vector.broadcast %cst_88 : f32 to vector<8x32xf32>
    %279 = arith.addf %278, %277 : vector<8x32xf32>
    %280 = arith.divf %278, %279 : vector<8x32xf32>
    %281 = vector.extract_strided_slice %269 {offsets = [0, 32], sizes = [8, 32], strides = [1, 1]} : vector<8x96xf32> to vector<8x32xf32>
    %282 = vector.extract_strided_slice %272 {offsets = [0, 32], sizes = [8, 32], strides = [1, 1]} : vector<8x96xf32> to vector<8x32xf32>
    %283 = arith.addf %281, %282 : vector<8x32xf32>
    %284 = arith.negf %283 : vector<8x32xf32>
    %285 = math.exp %284 : vector<8x32xf32>
    %cst_89 = arith.constant 1.000000e+00 : f32
    %286 = vector.broadcast %cst_89 : f32 to vector<8x32xf32>
    %287 = arith.addf %286, %285 : vector<8x32xf32>
    %288 = arith.divf %286, %287 : vector<8x32xf32>
    %289 = vector.extract_strided_slice %269 {offsets = [0, 64], sizes = [8, 32], strides = [1, 1]} : vector<8x96xf32> to vector<8x32xf32>
    %290 = vector.extract_strided_slice %272 {offsets = [0, 64], sizes = [8, 32], strides = [1, 1]} : vector<8x96xf32> to vector<8x32xf32>
    %291 = arith.mulf %280, %290 : vector<8x32xf32>
    %292 = arith.addf %289, %291 : vector<8x32xf32>
    %293 = math.tanh %292 : vector<8x32xf32>
    %cst_90 = arith.constant 1.000000e+00 : f32
    %294 = vector.broadcast %cst_90 : f32 to vector<8x32xf32>
    %295 = arith.subf %294, %288 : vector<8x32xf32>
    %296 = arith.mulf %295, %293 : vector<8x32xf32>
    %297 = arith.mulf %288, %263 : vector<8x32xf32>
    %298 = arith.addf %296, %297 : vector<8x32xf32>
    %299 = arith.index_cast %267 : i32 to index
    %c0_91 = arith.constant 0 : index
    %300 = vector.load %arg16[%299, %c0_91] : memref<64x32xf32, #tpu.memory_space<vmem>>, vector<8x32xf32>
    tpu.vector_store %arg16[%299, %c0_91], %298 {strides = array<i32>} : memref<64x32xf32, #tpu.memory_space<vmem>>, vector<8x32xf32>,
    %c7_i32 = arith.constant 7 : i32
    %c8_i32_92 = arith.constant 8 : i32
    %301 = arith.muli %c7_i32, %c8_i32_92 : i32
    %302 = tpu.assume_multiple %301, 8 : i32
    %303 = arith.index_cast %302 : i32 to index
    %c0_93 = arith.constant 0 : index
    %304 = vector.load %arg15[%303, %c0_93] : memref<64x96xf32, #tpu.memory_space<vmem>>, vector<8x96xf32>
    %cst_94 = arith.constant dense<0.000000e+00> : vector<8x96xf32>
    %305 = tpu.matmul %298, %53, %cst_94 {dimension_numbers = #tpu.dot_dimension_numbers<[1], [0], [0], [1], [0, 0, 1, 1], [], []>} : vector<8x32xf32>, vector<32x96xf32>, vector<8x96xf32> -> vector<8x96xf32>
    %306 = vector.broadcast %54 : vector<1x96xf32> to vector<8x96xf32>
    %307 = arith.addf %305, %306 : vector<8x96xf32>
    %308 = vector.extract_strided_slice %304 {offsets = [0, 0], sizes = [8, 32], strides = [1, 1]} : vector<8x96xf32> to vector<8x32xf32>
    %309 = vector.extract_strided_slice %307 {offsets = [0, 0], sizes = [8, 32], strides = [1, 1]} : vector<8x96xf32> to vector<8x32xf32>
    %310 = arith.addf %308, %309 : vector<8x32xf32>
    %311 = arith.negf %310 : vector<8x32xf32>
    %312 = math.exp %311 : vector<8x32xf32>
    %cst_95 = arith.constant 1.000000e+00 : f32
    %313 = vector.broadcast %cst_95 : f32 to vector<8x32xf32>
    %314 = arith.addf %313, %312 : vector<8x32xf32>
    %315 = arith.divf %313, %314 : vector<8x32xf32>
    %316 = vector.extract_strided_slice %304 {offsets = [0, 32], sizes = [8, 32], strides = [1, 1]} : vector<8x96xf32> to vector<8x32xf32>
    %317 = vector.extract_strided_slice %307 {offsets = [0, 32], sizes = [8, 32], strides = [1, 1]} : vector<8x96xf32> to vector<8x32xf32>
    %318 = arith.addf %316, %317 : vector<8x32xf32>
    %319 = arith.negf %318 : vector<8x32xf32>
    %320 = math.exp %319 : vector<8x32xf32>
    %cst_96 = arith.constant 1.000000e+00 : f32
    %321 = vector.broadcast %cst_96 : f32 to vector<8x32xf32>
    %322 = arith.addf %321, %320 : vector<8x32xf32>
    %323 = arith.divf %321, %322 : vector<8x32xf32>
    %324 = vector.extract_strided_slice %304 {offsets = [0, 64], sizes = [8, 32], strides = [1, 1]} : vector<8x96xf32> to vector<8x32xf32>
    %325 = vector.extract_strided_slice %307 {offsets = [0, 64], sizes = [8, 32], strides = [1, 1]} : vector<8x96xf32> to vector<8x32xf32>
    %326 = arith.mulf %315, %325 : vector<8x32xf32>
    %327 = arith.addf %324, %326 : vector<8x32xf32>
    %328 = math.tanh %327 : vector<8x32xf32>
    %cst_97 = arith.constant 1.000000e+00 : f32
    %329 = vector.broadcast %cst_97 : f32 to vector<8x32xf32>
    %330 = arith.subf %329, %323 : vector<8x32xf32>
    %331 = arith.mulf %330, %328 : vector<8x32xf32>
    %332 = arith.mulf %323, %298 : vector<8x32xf32>
    %333 = arith.addf %331, %332 : vector<8x32xf32>
    %334 = arith.index_cast %302 : i32 to index
    %c0_98 = arith.constant 0 : index
    %335 = vector.load %arg16[%334, %c0_98] : memref<64x32xf32, #tpu.memory_space<vmem>>, vector<8x32xf32>
    tpu.vector_store %arg16[%334, %c0_98], %333 {strides = array<i32>} : memref<64x32xf32, #tpu.memory_space<vmem>>, vector<8x32xf32>,
    %c8_i32_99 = arith.constant 8 : i32
    %c0_100 = arith.constant 0 : index
    %c0_101 = arith.constant 0 : index
    %336 = vector.load %arg14[%c0_100, %c0_101] : memref<8x32xf32, #tpu.memory_space<vmem>>, vector<8x32xf32>
    tpu.vector_store %arg14[%c0_100, %c0_101], %333 {strides = array<i32>} : memref<8x32xf32, #tpu.memory_space<vmem>>, vector<8x32xf32>,
    %c0_102 = arith.constant 0 : index
    %c0_103 = arith.constant 0 : index
    %337 = vector.load %arg16[%c0_102, %c0_103] : memref<64x32xf32, #tpu.memory_space<vmem>>, vector<64x32xf32>
    %c0_104 = arith.constant 0 : index
    %c0_105 = arith.constant 0 : index
    %338 = vector.load %arg11[%c0_104, %c0_105] : memref<32x128xf32, #tpu.memory_space<vmem>>, vector<32x128xf32>
    %cst_106 = arith.constant dense<0.000000e+00> : vector<64x128xf32>
    %339 = tpu.matmul %337, %338, %cst_106 {dimension_numbers = #tpu.dot_dimension_numbers<[1], [0], [0], [1], [0, 0, 1, 1], [], []>} : vector<64x32xf32>, vector<32x128xf32>, vector<64x128xf32> -> vector<64x128xf32>
    %c0_107 = arith.constant 0 : index
    %c0_108 = arith.constant 0 : index
    %340 = vector.load %arg12[%c0_107, %c0_108] : memref<1x128xf32, #tpu.memory_space<vmem>>, vector<1x128xf32>
    %341 = vector.broadcast %340 : vector<1x128xf32> to vector<64x128xf32>
    %342 = arith.addf %339, %341 : vector<64x128xf32>
    %cst_109 = arith.constant dense<0xFF800000> : vector<64xf32>
    %343 = vector.multi_reduction <maximumf>, %342, %cst_109 [1] : vector<64x128xf32> to vector<64xf32>
    %344 = vector.shape_cast %343 : vector<64xf32> to vector<64x1xf32>
    %345 = vector.broadcast %344 : vector<64x1xf32> to vector<64x128xf32>
    %346 = arith.subf %342, %345 : vector<64x128xf32>
    %347 = math.exp %346 : vector<64x128xf32>
    %cst_110 = arith.constant dense<0.000000e+00> : vector<64xf32>
    %348 = vector.multi_reduction <add>, %347, %cst_110 [1] : vector<64x128xf32> to vector<64xf32>
    %349 = vector.shape_cast %348 : vector<64xf32> to vector<64x1xf32>
    %350 = math.log %349 : vector<64x1xf32>
    %351 = arith.addf %350, %344 : vector<64x1xf32>
    %352 = vector.broadcast %351 : vector<64x1xf32> to vector<64x128xf32>
    %353 = arith.subf %342, %352 : vector<64x128xf32>
    %c0_111 = arith.constant 0 : index
    %c0_112 = arith.constant 0 : index
    %354 = vector.load %arg13[%c0_111, %c0_112] : memref<64x128xf32, #tpu.memory_space<vmem>>, vector<64x128xf32>
    tpu.vector_store %arg13[%c0_111, %c0_112], %353 {strides = array<i32>} : memref<64x128xf32, #tpu.memory_space<vmem>>, vector<64x128xf32>,
    return
  }
  func.func @transform_0(%arg0: i32) -> (i32, i32) {
    %c0_i32 = arith.constant 0 : i32
    %c0_i32_0 = arith.constant 0 : i32
    %c0_i32_1 = arith.constant 0 : i32
    return %c0_i32, %c0_i32_0 : i32, i32
  }
  func.func @transform_1(%arg0: i32) -> (i32, i32, i32) {
    %c0_i32 = arith.constant 0 : i32
    %c0_i32_0 = arith.constant 0 : i32
    %c0_i32_1 = arith.constant 0 : i32
    %c0_i32_2 = arith.constant 0 : i32
    return %c0_i32, %c0_i32_0, %c0_i32_1 : i32, i32, i32
  }
  func.func @transform_2(%arg0: i32) -> (i32, i32) {
    %c0_i32 = arith.constant 0 : i32
    %c0_i32_0 = arith.constant 0 : i32
    %c0_i32_1 = arith.constant 0 : i32
    return %c0_i32, %c0_i32_0 : i32, i32
  }
  func.func @transform_3(%arg0: i32) -> (i32, i32, i32) {
    %c0_i32 = arith.constant 0 : i32
    %c0_i32_0 = arith.constant 0 : i32
    %c0_i32_1 = arith.constant 0 : i32
    %c0_i32_2 = arith.constant 0 : i32
    return %c0_i32, %c0_i32_0, %c0_i32_1 : i32, i32, i32
  }
  func.func @transform_4(%arg0: i32) -> (i32, i32) {
    %c0_i32 = arith.constant 0 : i32
    %c0_i32_0 = arith.constant 0 : i32
    %c0_i32_1 = arith.constant 0 : i32
    return %c0_i32, %c0_i32_0 : i32, i32
  }
  func.func @transform_5(%arg0: i32) -> (i32, i32) {
    %c0_i32 = arith.constant 0 : i32
    %c0_i32_0 = arith.constant 0 : i32
    %c0_i32_1 = arith.constant 0 : i32
    return %c0_i32, %c0_i32_0 : i32, i32
  }
  func.func @transform_6(%arg0: i32) -> (i32, i32) {
    %c0_i32 = arith.constant 0 : i32
    %c0_i32_0 = arith.constant 0 : i32
    %c0_i32_1 = arith.constant 0 : i32
    return %c0_i32, %c0_i32_0 : i32, i32
  }
  func.func @transform_7(%arg0: i32) -> (i32, i32) {
    %c0_i32 = arith.constant 0 : i32
    %c0_i32_0 = arith.constant 0 : i32
    %c0_i32_1 = arith.constant 0 : i32
    return %c0_i32, %c0_i32_0 : i32, i32
  }
  func.func @transform_8(%arg0: i32) -> (i32, i32) {
    %c0_i32 = arith.constant 0 : i32
    %c0_i32_0 = arith.constant 0 : i32
    %c0_i32_1 = arith.constant 0 : i32
    return %c0_i32, %c0_i32_0 : i32, i32
  }
  func.func @transform_9(%arg0: i32) -> (i32, i32) {
    %c0_i32 = arith.constant 0 : i32
    %c0_i32_0 = arith.constant 0 : i32
    %c0_i32_1 = arith.constant 0 : i32
    return %c0_i32, %c0_i32_0 : i32, i32
  }
  func.func @transform_10(%arg0: i32) -> (i32, i32) {
    %c0_i32 = arith.constant 0 : i32
    %c0_i32_0 = arith.constant 0 : i32
    %c0_i32_1 = arith.constant 0 : i32
    return %c0_i32, %c0_i32_0 : i32, i32
  }
  func.func @transform_11(%arg0: i32) -> (i32, i32) {
    %c0_i32 = arith.constant 0 : i32
    %c0_i32_0 = arith.constant 0 : i32
    %c0_i32_1 = arith.constant 0 : i32
    return %c0_i32, %c0_i32_0 : i32, i32
  }
  func.func @transform_12(%arg0: i32) -> (i32, i32) {
    %c0_i32 = arith.constant 0 : i32
    %c0_i32_0 = arith.constant 0 : i32
    %c0_i32_1 = arith.constant 0 : i32
    return %c0_i32, %c0_i32_0 : i32, i32
  }
  func.func @transform_13(%arg0: i32) -> (i32, i32) {
    %c0_i32 = arith.constant 0 : i32
    %c0_i32_0 = arith.constant 0 : i32
    %c0_i32_1 = arith.constant 0 : i32
    return %c0_i32, %c0_i32_0 : i32, i32
  }
}

</mosaic_0001>

<llo_original>
// kernel: tpu_custom_call.1
$region0: #{tpu_custom_call.1}
  #allocation0 [shape = 'u32[]', space=smem, size = 0x4, offset = 0x4, fixed_abs, tag = 'smem constant byte address 0x4 - core index']
  #allocation1 [shape = 'u32[144,128]{1,0:T(1,128)}', space=vmem, size = 0x12000, scoped, tag = 'internal scratch']
  #allocation2 [shape = 'f32[64,96]{1,0:T(8,128)}', space=vmem, size = 0x8000, scoped, tag = 'scratch operand']
  #allocation3 [shape = 'f32[64,32]{1,0:T(8,128)}', space=vmem, size = 0x8000, scoped, tag = 'scratch operand']
  %s0 = inlined_call_operand.vmem [shape: s32[80,1], index: 0, kind: input, shape index: {}]
  %s1 = inlined_call_operand.vmem [shape: f32[3,128,32], index: 1, kind: input, shape index: {}]
  %s2 = inlined_call_operand.vmem [shape: f32[1,32], index: 2, kind: input, shape index: {}]
  %s3 = inlined_call_operand.vmem [shape: f32[3,32,32], index: 3, kind: input, shape index: {}]
  %s4 = inlined_call_operand.vmem [shape: f32[1,32], index: 4, kind: input, shape index: {}]
  %s5 = inlined_call_operand.vmem [shape: f32[8,32], index: 5, kind: input, shape index: {}]
  %s6 = inlined_call_operand.vmem [shape: f32[32,96], index: 6, kind: input, shape index: {}]
  %s7 = inlined_call_operand.vmem [shape: f32[32,96], index: 7, kind: input, shape index: {}]
  %s8 = inlined_call_operand.vmem [shape: f32[1,96], index: 8, kind: input, shape index: {}]
  %s9 = inlined_call_operand.vmem [shape: f32[1,96], index: 9, kind: input, shape index: {}]
  %s10 = inlined_call_operand.vmem [shape: f32[32,128], index: 10, kind: input, shape index: {}]
  %s11 = inlined_call_operand.vmem [shape: f32[1,128], index: 11, kind: input, shape index: {}]
  %s12 = inlined_call_operand.hbm [shape: f32[64,128], index: 12, kind: output, shape index: {0}]
  %s13 = inlined_call_operand.hbm [shape: f32[8,32], index: 13, kind: output, shape index: {1}]
  %14 = xla_tuple %s12, %s13
  %s15 = sld [smem:[#allocation0]]
  $region66: #{tpu_custom_call.1} parent=0
    _
  %s17 = ssub.s32 1, %s15
  %s18 = scalar_select 0, %s17, %s15
  $region1: #{tpu_custom_call.1} parent=0
    #allocation4 [shape = 'u8[32768]{0}', space=vmem, size = 0x8000, scoped, tag = 'output window, operand 0, single buffered']
    #allocation5 [shape = 's32[1]{0}', space=sflag, size = 0x4, scoped, tag = 'scoped memory for tpu_custom_call.1']
    #allocation6 [shape = 'u8[4096]{0}', space=vmem, size = 0x1000, scoped, tag = 'output window, operand 1, single buffered']
    #allocation7 [shape = 's32[1]{0}', space=sflag, size = 0x4, scoped, tag = 'scoped memory for tpu_custom_call.1']
    %19 = vsyncpa [#allocation5], 0
    %20 = vsyncpa [#allocation7], 0
    // Predicated region
    $region2: #{tpu_custom_call.1} parent=1 // pred_check
      _
    $region3: #{tpu_custom_call.1} parent=1 // pred_check_branch
      %22 = sbr.rel (0) target = $region5
    $region4: #{tpu_custom_call.1} parent=1 // pred_region
      _
    $region5: #{tpu_custom_call.1} parent=1 // pred_fallthru
      _
    // Predicated region
    $region6: #{tpu_custom_call.1} parent=1 // pred_check
      _
    $region7: #{tpu_custom_call.1} parent=1 // pred_check_branch
      %24 = sbr.rel (0) target = $region9
    $region8: #{tpu_custom_call.1} parent=1 // pred_region
      _
    $region9: #{tpu_custom_call.1} parent=1 // pred_fallthru
      _
    // Predicated region
    $region10: #{tpu_custom_call.1} parent=1 // pred_check
      _
    $region11: #{tpu_custom_call.1} parent=1 // pred_check_branch
      %26 = sbr.rel (0) target = $region13
    $region12: #{tpu_custom_call.1} parent=1 // pred_region
      _
    $region13: #{tpu_custom_call.1} parent=1 // pred_fallthru
      _
    // Predicated region
    $region14: #{tpu_custom_call.1} parent=1 // pred_check
      _
    $region15: #{tpu_custom_call.1} parent=1 // pred_check_branch
      %28 = sbr.rel (0) target = $region17
    $region16: #{tpu_custom_call.1} parent=1 // pred_region
      _
    $region17: #{tpu_custom_call.1} parent=1 // pred_fallthru
      _
    // Predicated region
    $region18: #{tpu_custom_call.1} parent=1 // pred_check
      _
    $region19: #{tpu_custom_call.1} parent=1 // pred_check_branch
      %30 = sbr.rel (0) target = $region21
    $region20: #{tpu_custom_call.1} parent=1 // pred_region
      _
    $region21: #{tpu_custom_call.1} parent=1 // pred_fallthru
      _
    // Predicated region
    $region22: #{tpu_custom_call.1} parent=1 // pred_check
      _
    $region23: #{tpu_custom_call.1} parent=1 // pred_check_branch
      %32 = sbr.rel (0) target = $region25
    $region24: #{tpu_custom_call.1} parent=1 // pred_region
      _
    $region25: #{tpu_custom_call.1} parent=1 // pred_fallthru
      _
    // Predicated region
    $region26: #{tpu_custom_call.1} parent=1 // pred_check
      _
    $region27: #{tpu_custom_call.1} parent=1 // pred_check_branch
      %34 = sbr.rel (0) target = $region29
    $region28: #{tpu_custom_call.1} parent=1 // pred_region
      _
    $region29: #{tpu_custom_call.1} parent=1 // pred_fallthru
      _
    // Predicated region
    $region30: #{tpu_custom_call.1} parent=1 // pred_check
      _
    $region31: #{tpu_custom_call.1} parent=1 // pred_check_branch
      %36 = sbr.rel (0) target = $region33
    $region32: #{tpu_custom_call.1} parent=1 // pred_region
      _
    $region33: #{tpu_custom_call.1} parent=1 // pred_fallthru
      _
    // Predicated region
    $region34: #{tpu_custom_call.1} parent=1 // pred_check
      _
    $region35: #{tpu_custom_call.1} parent=1 // pred_check_branch
      %38 = sbr.rel (0) target = $region37
    $region36: #{tpu_custom_call.1} parent=1 // pred_region
      _
    $region37: #{tpu_custom_call.1} parent=1 // pred_fallthru
      _
    // Predicated region
    $region38: #{tpu_custom_call.1} parent=1 // pred_check
      _
    $region39: #{tpu_custom_call.1} parent=1 // pred_check_branch
      %40 = sbr.rel (0) target = $region41
    $region40: #{tpu_custom_call.1} parent=1 // pred_region
      _
    $region41: #{tpu_custom_call.1} parent=1 // pred_fallthru
      _
    // Predicated region
    $region42: #{tpu_custom_call.1} parent=1 // pred_check
      _
    $region43: #{tpu_custom_call.1} parent=1 // pred_check_branch
      %42 = sbr.rel (0) target = $region45
    $region44: #{tpu_custom_call.1} parent=1 // pred_region
      _
    $region45: #{tpu_custom_call.1} parent=1 // pred_fallthru
      _
    // Predicated region
    $region46: #{tpu_custom_call.1} parent=1 // pred_check
      _
    $region47: #{tpu_custom_call.1} parent=1 // pred_check_branch
      %44 = sbr.rel (0) target = $region49
    $region48: #{tpu_custom_call.1} parent=1 // pred_region
      _
    $region49: #{tpu_custom_call.1} parent=1 // pred_fallthru
      _
    %v45 = vld [vmem:[%s0] sm:$0xff]
    %v46 = vld [vmem:[%s0 + $0x8] sm:$0xff]
    %v47 = vld [vmem:[%s0 + $0x10] sm:$0xff]
    %v48 = vld [vmem:[%s0 + $0x18] sm:$0xff]
    %v49 = vld [vmem:[%s0 + $0x20] sm:$0xff]
    %v50 = vld [vmem:[%s0 + $0x28] sm:$0xff]
    %v51 = vld [vmem:[%s0 + $0x30] sm:$0xff]
    %v52 = vld [vmem:[%s0 + $0x38] sm:$0xff]
    %v53 = vld [vmem:[%s0 + $0x40] sm:$0xff]
    %v54 = vld [vmem:[%s0 + $0x48] sm:$0xff]
    %v55 = vlaneseq
    %v56 = vand.u32 %v55, 127
    %57 = vset.pattern.permute.xlu0 0
    %58 = vperm.xlu0 %57, %v45
    %v59 = vpop.permute.xlu0 %58
    %60 = vset.pattern.permute.xlu0 0
    %61 = vperm.xlu0 %60, %v46
    %v62 = vpop.permute.xlu0 %61
    %63 = vset.pattern.permute.xlu0 0
    %64 = vperm.xlu0 %63, %v47
    %v65 = vpop.permute.xlu0 %64
    %66 = vset.pattern.permute.xlu0 0
    %67 = vperm.xlu0 %66, %v48
    %v68 = vpop.permute.xlu0 %67
    %69 = vset.pattern.permute.xlu0 0
    %70 = vperm.xlu0 %69, %v49
    %v71 = vpop.permute.xlu0 %70
    %72 = vset.pattern.permute.xlu0 0
    %73 = vperm.xlu0 %72, %v50
    %v74 = vpop.permute.xlu0 %73
    %75 = vset.pattern.permute.xlu0 0
    %76 = vperm.xlu0 %75, %v51
    %v77 = vpop.permute.xlu0 %76
    %78 = vset.pattern.permute.xlu0 0
    %79 = vperm.xlu0 %78, %v52
    %v80 = vpop.permute.xlu0 %79
    %81 = vset.pattern.permute.xlu0 0
    %82 = vperm.xlu0 %81, %v53
    %v83 = vpop.permute.xlu0 %82
    %84 = vset.pattern.permute.xlu0 0
    %85 = vperm.xlu0 %84, %v54
    %v86 = vpop.permute.xlu0 %85
    %vm87 = vcmp.eq.s32.totalorder %v56, %v59
    %vm88 = vcmp.eq.s32.totalorder %v56, %v62
    %vm89 = vcmp.eq.s32.totalorder %v56, %v65
    %vm90 = vcmp.eq.s32.totalorder %v56, %v68
    %vm91 = vcmp.eq.s32.totalorder %v56, %v71
    %vm92 = vcmp.eq.s32.totalorder %v56, %v74
    %vm93 = vcmp.eq.s32.totalorder %v56, %v77
    %vm94 = vcmp.eq.s32.totalorder %v56, %v80
    %vm95 = vcmp.eq.s32.totalorder %v56, %v83
    %vm96 = vcmp.eq.s32.totalorder %v56, %v86
    %v97 = vsel %vm87, 1.0, 0.0
    %v98 = vsel %vm88, 1.0, 0.0
    %v99 = vsel %vm89, 1.0, 0.0
    %v100 = vsel %vm90, 1.0, 0.0
    %v101 = vsel %vm91, 1.0, 0.0
    %v102 = vsel %vm92, 1.0, 0.0
    %v103 = vsel %vm93, 1.0, 0.0
    %v104 = vsel %vm94, 1.0, 0.0
    %v105 = vsel %vm95, 1.0, 0.0
    %v106 = vsel %vm96, 1.0, 0.0
    %v107 = vld [vmem:[%s1] sm:$0xff]
    %v108 = vld [vmem:[%s1 + $0x8] sm:$0xff]
    %v109 = vld [vmem:[%s1 + $0x10] sm:$0xff]
    %v110 = vld [vmem:[%s1 + $0x18] sm:$0xff]
    %v111 = vld [vmem:[%s1 + $0x20] sm:$0xff]
    %v112 = vld [vmem:[%s1 + $0x28] sm:$0xff]
    %v113 = vld [vmem:[%s1 + $0x30] sm:$0xff]
    %v114 = vld [vmem:[%s1 + $0x38] sm:$0xff]
    %v115 = vld [vmem:[%s1 + $0x40] sm:$0xff]
    %v116 = vld [vmem:[%s1 + $0x48] sm:$0xff]
    %v117 = vld [vmem:[%s1 + $0x50] sm:$0xff]
    %v118 = vld [vmem:[%s1 + $0x58] sm:$0xff]
    %v119 = vld [vmem:[%s1 + $0x60] sm:$0xff]
    %v120 = vld [vmem:[%s1 + $0x68] sm:$0xff]
    %v121 = vld [vmem:[%s1 + $0x70] sm:$0xff]
    %v122 = vld [vmem:[%s1 + $0x78] sm:$0xff]
    %s123 = scalar_lea.vmem %s1, 128
    %v124 = vld [vmem:[%s123] sm:$0xff]
    %v125 = vld [vmem:[%s123 + $0x8] sm:$0xff]
    %v126 = vld [vmem:[%s123 + $0x10] sm:$0xff]
    %v127 = vld [vmem:[%s123 + $0x18] sm:$0xff]
    %v128 = vld [vmem:[%s123 + $0x20] sm:$0xff]
    %v129 = vld [vmem:[%s123 + $0x28] sm:$0xff]
    %v130 = vld [vmem:[%s123 + $0x30] sm:$0xff]
    %v131 = vld [vmem:[%s123 + $0x38] sm:$0xff]
    %v132 = vld [vmem:[%s123 + $0x40] sm:$0xff]
    %v133 = vld [vmem:[%s123 + $0x48] sm:$0xff]
    %v134 = vld [vmem:[%s123 + $0x50] sm:$0xff]
    %v135 = vld [vmem:[%s123 + $0x58] sm:$0xff]
    %v136 = vld [vmem:[%s123 + $0x60] sm:$0xff]
    %v137 = vld [vmem:[%s123 + $0x68] sm:$0xff]
    %v138 = vld [vmem:[%s123 + $0x70] sm:$0xff]
    %v139 = vld [vmem:[%s123 + $0x78] sm:$0xff]
    %140 = vmatprep.subr.mxu0 0.0
    %141 = vmatpush1.msra.mxu0 %v124
    %142 = vmatprep.subr.mxu0 0.0
    %143 = vmatpush1.msra.mxu0 %v125
    %144 = vmatprep.subr.mxu0 0.0
    %145 = vmatpush1.msra.mxu0 %v126
    %146 = vmatprep.subr.mxu0 0.0
    %147 = vmatpush1.msra.mxu0 %v127
    %148 = vmatprep.subr.mxu0 0.0
    %149 = vmatpush1.msra.mxu0 %v128
    %150 = vmatprep.subr.mxu0 0.0
    %151 = vmatpush1.msra.mxu0 %v129
    %152 = vmatprep.subr.mxu0 0.0
    %153 = vmatpush1.msra.mxu0 %v130
    %154 = vmatprep.subr.mxu0 0.0
    %155 = vmatpush1.msra.mxu0 %v131
    %156 = vmatprep.subr.mxu0 0.0
    %157 = vmatpush1.msra.mxu0 %v132
    %158 = vmatprep.subr.mxu0 0.0
    %159 = vmatpush1.msra.mxu0 %v133
    %160 = vmatprep.subr.mxu0 0.0
    %161 = vmatpush1.msra.mxu0 %v134
    %162 = vmatprep.subr.mxu0 0.0
    %163 = vmatpush1.msra.mxu0 %v135
    %164 = vmatprep.subr.mxu0 0.0
    %165 = vmatpush1.msra.mxu0 %v136
    %166 = vmatprep.subr.mxu0 0.0
    %167 = vmatpush1.msra.mxu0 %v137
    %168 = vmatprep.subr.mxu0 0.0
    %169 = vmatpush1.msra.mxu0 %v138
    %170 = vmatprep.subr.mxu0 0.0
    %171 = vmatpush1.msra.mxu0 %v139
    %172 = vmatprep.subr.mxu0 0.0
    %173 = vmatpush1.msra.mxu0 0.0
    %174 = vmatprep.subr.mxu0 0.0
    %175 = vmatpush1.msra.mxu0 0.0
    %176 = vmatprep.subr.mxu0 0.0
    %177 = vmatpush1.msra.mxu0 0.0
    %178 = vmatprep.subr.mxu0 0.0
    %179 = vmatpush1.msra.mxu0 0.0
    %180 = vmatprep.subr.mxu0 0.0
    %181 = vmatpush1.msra.mxu0 0.0
    %182 = vmatprep.subr.mxu0 0.0
    %183 = vmatpush1.msra.mxu0 0.0
    %184 = vmatprep.subr.mxu0 0.0
    %185 = vmatpush1.msra.mxu0 0.0
    %186 = vmatprep.subr.mxu0 0.0
    %187 = vmatpush1.msra.mxu0 0.0
    %188 = vmatprep.subr.mxu0 0.0
    %189 = vmatpush1.msra.mxu0 0.0
    %190 = vmatprep.subr.mxu0 0.0
    %191 = vmatpush1.msra.mxu0 0.0
    %192 = vmatprep.subr.mxu0 0.0
    %193 = vmatpush1.msra.mxu0 0.0
    %194 = vmatprep.subr.mxu0 0.0
    %195 = vmatpush1.msra.mxu0 0.0
    %196 = vmatprep.subr.mxu0 0.0
    %197 = vmatpush1.msra.mxu0 0.0
    %198 = vmatprep.subr.mxu0 0.0
    %199 = vmatpush1.msra.mxu0 0.0
    %200 = vmatprep.subr.mxu0 0.0
    %201 = vmatpush1.msra.mxu0 0.0
    %202 = vmatprep.subr.mxu0 0.0
    %203 = vmatpush1.msra.mxu0 0.0
    %204 = vmatprep.mubr.f32.mxu0 0.0
    %205 = vmatmul.mubr.f32.gmra.mrb[0].mxu0 %v98
    %v206 = vpop.f32.mrb[0].mxu0
    %v207 = vadd.f32 0.0, %v206
    %v208 = vpop.f32.mrb[0].mxu0
    %209 = vmatprep.mubr.f32.mxu0 0.0
    %210 = vmatmul.mubr.f32.gmra.mrb[0].mxu0 %v99
    %v211 = vpop.f32.mrb[0].mxu0
    %v212 = vadd.f32 0.0, %v211
    %v213 = vpop.f32.mrb[0].mxu0
    %214 = vmatprep.mubr.f32.mxu0 0.0
    %215 = vmatmul.mubr.f32.gmra.mrb[0].mxu0 %v100
    %v216 = vpop.f32.mrb[0].mxu0
    %v217 = vadd.f32 0.0, %v216
    %v218 = vpop.f32.mrb[0].mxu0
    %219 = vmatprep.mubr.f32.mxu0 0.0
    %220 = vmatmul.mubr.f32.gmra.mrb[0].mxu0 %v101
    %v221 = vpop.f32.mrb[0].mxu0
    %v222 = vadd.f32 0.0, %v221
    %v223 = vpop.f32.mrb[0].mxu0
    %224 = vmatprep.mubr.f32.mxu0 0.0
    %225 = vmatmul.mubr.f32.gmra.mrb[0].mxu0 %v102
    %v226 = vpop.f32.mrb[0].mxu0
    %v227 = vadd.f32 0.0, %v226
    %v228 = vpop.f32.mrb[0].mxu0
    %229 = vmatprep.mubr.f32.mxu0 0.0
    %230 = vmatmul.mubr.f32.gmra.mrb[0].mxu0 %v103
    %v231 = vpop.f32.mrb[0].mxu0
    %v232 = vadd.f32 0.0, %v231
    %v233 = vpop.f32.mrb[0].mxu0
    %234 = vmatprep.mubr.f32.mxu0 0.0
    %235 = vmatmul.mubr.f32.gmra.mrb[0].mxu0 %v104
    %v236 = vpop.f32.mrb[0].mxu0
    %v237 = vadd.f32 0.0, %v236
    %v238 = vpop.f32.mrb[0].mxu0
    %239 = vmatprep.mubr.f32.mxu0 0.0
    %240 = vmatmul.mubr.f32.gmra.mrb[0].mxu0 %v105
    %v241 = vpop.f32.mrb[0].mxu0
    %v242 = vadd.f32 0.0, %v241
    %v243 = vpop.f32.mrb[0].mxu0
    %244 = vdwg.mxu0
    %245 = vmatprep.subr.mxu0 0.0
    %246 = vmatpush1.msra.mxu0 %v107
    %247 = vmatprep.subr.mxu0 0.0
    %248 = vmatpush1.msra.mxu0 %v108
    %249 = vmatprep.subr.mxu0 0.0
    %250 = vmatpush1.msra.mxu0 %v109
    %251 = vmatprep.subr.mxu0 0.0
    %252 = vmatpush1.msra.mxu0 %v110
    %253 = vmatprep.subr.mxu0 0.0
    %254 = vmatpush1.msra.mxu0 %v111
    %255 = vmatprep.subr.mxu0 0.0
    %256 = vmatpush1.msra.mxu0 %v112
    %257 = vmatprep.subr.mxu0 0.0
    %258 = vmatpush1.msra.mxu0 %v113
    %259 = vmatprep.subr.mxu0 0.0
    %260 = vmatpush1.msra.mxu0 %v114
    %261 = vmatprep.subr.mxu0 0.0
    %262 = vmatpush1.msra.mxu0 %v115
    %263 = vmatprep.subr.mxu0 0.0
    %264 = vmatpush1.msra.mxu0 %v116
    %265 = vmatprep.subr.mxu0 0.0
    %266 = vmatpush1.msra.mxu0 %v117
    %267 = vmatprep.subr.mxu0 0.0
    %268 = vmatpush1.msra.mxu0 %v118
    %269 = vmatprep.subr.mxu0 0.0
    %270 = vmatpush1.msra.mxu0 %v119
    %271 = vmatprep.subr.mxu0 0.0
    %272 = vmatpush1.msra.mxu0 %v120
    %273 = vmatprep.subr.mxu0 0.0
    %274 = vmatpush1.msra.mxu0 %v121
    %275 = vmatprep.subr.mxu0 0.0
    %276 = vmatpush1.msra.mxu0 %v122
    %277 = vmatprep.subr.mxu0 0.0
    %278 = vmatpush1.msra.mxu0 0.0
    %279 = vmatprep.subr.mxu0 0.0
    %280 = vmatpush1.msra.mxu0 0.0
    %281 = vmatprep.subr.mxu0 0.0
    %282 = vmatpush1.msra.mxu0 0.0
    %283 = vmatprep.subr.mxu0 0.0
    %284 = vmatpush1.msra.mxu0 0.0
    %285 = vmatprep.subr.mxu0 0.0
    %286 = vmatpush1.msra.mxu0 0.0
    %287 = vmatprep.subr.mxu0 0.0
    %288 = vmatpush1.msra.mxu0 0.0
    %289 = vmatprep.subr.mxu0 0.0
    %290 = vmatpush1.msra.mxu0 0.0
    %291 = vmatprep.subr.mxu0 0.0
    %292 = vmatpush1.msra.mxu0 0.0
    %293 = vmatprep.subr.mxu0 0.0
    %294 = vmatpush1.msra.mxu0 0.0
    %295 = vmatprep.subr.mxu0 0.0
    %296 = vmatpush1.msra.mxu0 0.0
    %297 = vmatprep.subr.mxu0 0.0
    %298 = vmatpush1.msra.mxu0 0.0
    %299 = vmatprep.subr.mxu0 0.0
    %300 = vmatpush1.msra.mxu0 0.0
    %301 = vmatprep.subr.mxu0 0.0
    %302 = vmatpush1.msra.mxu0 0.0
    %303 = vmatprep.subr.mxu0 0.0
    %304 = vmatpush1.msra.mxu0 0.0
    %305 = vmatprep.subr.mxu0 0.0
    %306 = vmatpush1.msra.mxu0 0.0
    %307 = vmatprep.subr.mxu0 0.0
    %308 = vmatpush1.msra.mxu0 0.0
    %309 = vmatprep.mubr.f32.mxu0 0.0
    %310 = vmatmul.mubr.f32.gmra.mrb[0].mxu0 %v97
    %v311 = vpop.f32.mrb[0].mxu0
    %v312 = vadd.f32 %v207, %v311
    %v313 = vpop.f32.mrb[0].mxu0
    %314 = vmatprep.mubr.f32.mxu0 0.0
    %315 = vmatmul.mubr.f32.gmra.mrb[0].mxu0 %v98
    %v316 = vpop.f32.mrb[0].mxu0
    %v317 = vadd.f32 %v212, %v316
    %v318 = vpop.f32.mrb[0].mxu0
    %319 = vmatprep.mubr.f32.mxu0 0.0
    %320 = vmatmul.mubr.f32.gmra.mrb[0].mxu0 %v99
    %v321 = vpop.f32.mrb[0].mxu0
    %v322 = vadd.f32 %v217, %v321
    %v323 = vpop.f32.mrb[0].mxu0
    %324 = vmatprep.mubr.f32.mxu0 0.0
    %325 = vmatmul.mubr.f32.gmra.mrb[0].mxu0 %v100
    %v326 = vpop.f32.mrb[0].mxu0
    %v327 = vadd.f32 %v222, %v326
    %v328 = vpop.f32.mrb[0].mxu0
    %329 = vmatprep.mubr.f32.mxu0 0.0
    %330 = vmatmul.mubr.f32.gmra.mrb[0].mxu0 %v101
    %v331 = vpop.f32.mrb[0].mxu0
    %v332 = vadd.f32 %v227, %v331
    %v333 = vpop.f32.mrb[0].mxu0
    %334 = vmatprep.mubr.f32.mxu0 0.0
    %335 = vmatmul.mubr.f32.gmra.mrb[0].mxu0 %v102
    %v336 = vpop.f32.mrb[0].mxu0
    %v337 = vadd.f32 %v232, %v336
    %v338 = vpop.f32.mrb[0].mxu0
    %339 = vmatprep.mubr.f32.mxu0 0.0
    %340 = vmatmul.mubr.f32.gmra.mrb[0].mxu0 %v103
    %v341 = vpop.f32.mrb[0].mxu0
    %v342 = vadd.f32 %v237, %v341
    %v343 = vpop.f32.mrb[0].mxu0
    %344 = vmatprep.mubr.f32.mxu0 0.0
    %345 = vmatmul.mubr.f32.gmra.mrb[0].mxu0 %v104
    %v346 = vpop.f32.mrb[0].mxu0
    %v347 = vadd.f32 %v242, %v346
    %v348 = vpop.f32.mrb[0].mxu0
    %349 = vdwg.mxu0
    %s350 = scalar_lea.vmem %s1, 256
    %v351 = vld [vmem:[%s350] sm:$0xff]
    %v352 = vld [vmem:[%s350 + $0x8] sm:$0xff]
    %v353 = vld [vmem:[%s350 + $0x10] sm:$0xff]
    %v354 = vld [vmem:[%s350 + $0x18] sm:$0xff]
    %v355 = vld [vmem:[%s350 + $0x20] sm:$0xff]
    %v356 = vld [vmem:[%s350 + $0x28] sm:$0xff]
    %v357 = vld [vmem:[%s350 + $0x30] sm:$0xff]
    %v358 = vld [vmem:[%s350 + $0x38] sm:$0xff]
    %v359 = vld [vmem:[%s350 + $0x40] sm:$0xff]
    %v360 = vld [vmem:[%s350 + $0x48] sm:$0xff]
    %v361 = vld [vmem:[%s350 + $0x50] sm:$0xff]
    %v362 = vld [vmem:[%s350 + $0x58] sm:$0xff]
    %v363 = vld [vmem:[%s350 + $0x60] sm:$0xff]
    %v364 = vld [vmem:[%s350 + $0x68] sm:$0xff]
    %v365 = vld [vmem:[%s350 + $0x70] sm:$0xff]
    %v366 = vld [vmem:[%s350 + $0x78] sm:$0xff]
    %367 = vmatprep.subr.mxu0 0.0
    %368 = vmatpush1.msra.mxu0 %v351
    %369 = vmatprep.subr.mxu0 0.0
    %370 = vmatpush1.msra.mxu0 %v352
    %371 = vmatprep.subr.mxu0 0.0
    %372 = vmatpush1.msra.mxu0 %v353
    %373 = vmatprep.subr.mxu0 0.0
    %374 = vmatpush1.msra.mxu0 %v354
    %375 = vmatprep.subr.mxu0 0.0
    %376 = vmatpush1.msra.mxu0 %v355
    %377 = vmatprep.subr.mxu0 0.0
    %378 = vmatpush1.msra.mxu0 %v356
    %379 = vmatprep.subr.mxu0 0.0
    %380 = vmatpush1.msra.mxu0 %v357
    %381 = vmatprep.subr.mxu0 0.0
    %382 = vmatpush1.msra.mxu0 %v358
    %383 = vmatprep.subr.mxu0 0.0
    %384 = vmatpush1.msra.mxu0 %v359
    %385 = vmatprep.subr.mxu0 0.0
    %386 = vmatpush1.msra.mxu0 %v360
    %387 = vmatprep.subr.mxu0 0.0
    %388 = vmatpush1.msra.mxu0 %v361
    %389 = vmatprep.subr.mxu0 0.0
    %390 = vmatpush1.msra.mxu0 %v362
    %391 = vmatprep.subr.mxu0 0.0
    %392 = vmatpush1.msra.mxu0 %v363
    %393 = vmatprep.subr.mxu0 0.0
    %394 = vmatpush1.msra.mxu0 %v364
    %395 = vmatprep.subr.mxu0 0.0
    %396 = vmatpush1.msra.mxu0 %v365
    %397 = vmatprep.subr.mxu0 0.0
    %398 = vmatpush1.msra.mxu0 %v366
    %399 = vmatprep.subr.mxu0 0.0
    %400 = vmatpush1.msra.mxu0 0.0
    %401 = vmatprep.subr.mxu0 0.0
    %402 = vmatpush1.msra.mxu0 0.0
    %403 = vmatprep.subr.mxu0 0.0
    %404 = vmatpush1.msra.mxu0 0.0
    %405 = vmatprep.subr.mxu0 0.0
    %406 = vmatpush1.msra.mxu0 0.0
    %407 = vmatprep.subr.mxu0 0.0
    %408 = vmatpush1.msra.mxu0 0.0
    %409 = vmatprep.subr.mxu0 0.0
    %410 = vmatpush1.msra.mxu0 0.0
    %411 = vmatprep.subr.mxu0 0.0
    %412 = vmatpush1.msra.mxu0 0.0
    %413 = vmatprep.subr.mxu0 0.0
    %414 = vmatpush1.msra.mxu0 0.0
    %415 = vmatprep.subr.mxu0 0.0
    %416 = vmatpush1.msra.mxu0 0.0
    %417 = vmatprep.subr.mxu0 0.0
    %418 = vmatpush1.msra.mxu0 0.0
    %419 = vmatprep.subr.mxu0 0.0
    %420 = vmatpush1.msra.mxu0 0.0
    %421 = vmatprep.subr.mxu0 0.0
    %422 = vmatpush1.msra.mxu0 0.0
    %423 = vmatprep.subr.mxu0 0.0
    %424 = vmatpush1.msra.mxu0 0.0
    %425 = vmatprep.subr.mxu0 0.0
    %426 = vmatpush1.msra.mxu0 0.0
    %427 = vmatprep.subr.mxu0 0.0
    %428 = vmatpush1.msra.mxu0 0.0
    %429 = vmatprep.subr.mxu0 0.0
    %430 = vmatpush1.msra.mxu0 0.0
    %431 = vmatprep.mubr.f32.mxu0 0.0
    %432 = vmatmul.mubr.f32.gmra.mrb[0].mxu0 %v99
    %v433 = vpop.f32.mrb[0].mxu0
    %v434 = vadd.f32 0.0, %v433
    %v435 = vpop.f32.mrb[0].mxu0
    %436 = vmatprep.mubr.f32.mxu0 0.0
    %437 = vmatmul.mubr.f32.gmra.mrb[0].mxu0 %v100
    %v438 = vpop.f32.mrb[0].mxu0
    %v439 = vadd.f32 0.0, %v438
    %v440 = vpop.f32.mrb[0].mxu0
    %441 = vmatprep.mubr.f32.mxu0 0.0
    %442 = vmatmul.mubr.f32.gmra.mrb[0].mxu0 %v101
    %v443 = vpop.f32.mrb[0].mxu0
    %v444 = vadd.f32 0.0, %v443
    %v445 = vpop.f32.mrb[0].mxu0
    %446 = vmatprep.mubr.f32.mxu0 0.0
    %447 = vmatmul.mubr.f32.gmra.mrb[0].mxu0 %v102
    %v448 = vpop.f32.mrb[0].mxu0
    %v449 = vadd.f32 0.0, %v448
    %v450 = vpop.f32.mrb[0].mxu0
    %451 = vmatprep.mubr.f32.mxu0 0.0
    %452 = vmatmul.mubr.f32.gmra.mrb[0].mxu0 %v103
    %v453 = vpop.f32.mrb[0].mxu0
    %v454 = vadd.f32 0.0, %v453
    %v455 = vpop.f32.mrb[0].mxu0
    %456 = vmatprep.mubr.f32.mxu0 0.0
    %457 = vmatmul.mubr.f32.gmra.mrb[0].mxu0 %v104
    %v458 = vpop.f32.mrb[0].mxu0
    %v459 = vadd.f32 0.0, %v458
    %v460 = vpop.f32.mrb[0].mxu0
    %461 = vmatprep.mubr.f32.mxu0 0.0
    %462 = vmatmul.mubr.f32.gmra.mrb[0].mxu0 %v105
    %v463 = vpop.f32.mrb[0].mxu0
    %v464 = vadd.f32 0.0, %v463
    %v465 = vpop.f32.mrb[0].mxu0
    %466 = vmatprep.mubr.f32.mxu0 0.0
    %467 = vmatmul.mubr.f32.gmra.mrb[0].mxu0 %v106
    %v468 = vpop.f32.mrb[0].mxu0
    %v469 = vadd.f32 0.0, %v468
    %v470 = vpop.f32.mrb[0].mxu0
    %471 = vdwg.mxu0
    %v472 = vadd.f32 %v312, %v434
    %v473 = vadd.f32 %v317, %v439
    %v474 = vadd.f32 %v322, %v444
    %v475 = vadd.f32 %v327, %v449
    %v476 = vadd.f32 %v332, %v454
    %v477 = vadd.f32 %v337, %v459
    %v478 = vadd.f32 %v342, %v464
    %v479 = vadd.f32 %v347, %v469
    %v480 = vld [vmem:[%s2] sm:$0x1]
    %v482 = vlaneseq
    %v483 = vshrl.u32 %v482, 7
    %v484 = vsub.s32 0, %v483
    %v485 = vrot.slane %v480, %v484
    %v487 = vadd.f32 %v472, %v485
    %v488 = vadd.f32 %v473, %v485
    %v489 = vadd.f32 %v474, %v485
    %v490 = vadd.f32 %v475, %v485
    %v491 = vadd.f32 %v476, %v485
    %v492 = vadd.f32 %v477, %v485
    %v493 = vadd.f32 %v478, %v485
    %v494 = vadd.f32 %v479, %v485
    %v495 = vmax.f32 %v487, 0.0
    %v496 = vmax.f32 %v488, 0.0
    %v497 = vmax.f32 %v489, 0.0
    %v498 = vmax.f32 %v490, 0.0
    %v499 = vmax.f32 %v491, 0.0
    %v500 = vmax.f32 %v492, 0.0
    %v501 = vmax.f32 %v493, 0.0
    %v502 = vmax.f32 %v494, 0.0
    %v503 = vld [vmem:[%s3] sm:$0xff]
    %v504 = vld [vmem:[%s3 + $0x8] sm:$0xff]
    %v505 = vld [vmem:[%s3 + $0x10] sm:$0xff]
    %v506 = vld [vmem:[%s3 + $0x18] sm:$0xff]
    %s507 = scalar_lea.vmem %s3, 32
    %v508 = vld [vmem:[%s507] sm:$0xff]
    %v509 = vld [vmem:[%s507 + $0x8] sm:$0xff]
    %v510 = vld [vmem:[%s507 + $0x10] sm:$0xff]
    %v511 = vld [vmem:[%s507 + $0x18] sm:$0xff]
    %vm512 = vcmask 261120
    %v514 = vsel %vm512, %v495, 0
    %v517 = vsel %vm512, %v496, 0
    %v520 = vsel %vm512, %v497, 0
    %v523 = vsel %vm512, %v498, 0
    %v526 = vsel %vm512, %v499, 0
    %v529 = vsel %vm512, %v500, 0
    %v532 = vsel %vm512, %v501, 0
    %v535 = vsel %vm512, %v502, 0
    %537 = vmatprep.subr.mxu0 0.0
    %538 = vmatpush1.msra.mxu0 %v508
    %539 = vmatprep.subr.mxu0 0.0
    %540 = vmatpush1.msra.mxu0 %v509
    %541 = vmatprep.subr.mxu0 0.0
    %542 = vmatpush1.msra.mxu0 %v510
    %543 = vmatprep.subr.mxu0 0.0
    %544 = vmatpush1.msra.mxu0 %v511
    %545 = vmatprep.subr.mxu0 0.0
    %546 = vmatpush1.msra.mxu0 0.0
    %547 = vmatprep.subr.mxu0 0.0
    %548 = vmatpush1.msra.mxu0 0.0
    %549 = vmatprep.subr.mxu0 0.0
    %550 = vmatpush1.msra.mxu0 0.0
    %551 = vmatprep.subr.mxu0 0.0
    %552 = vmatpush1.msra.mxu0 0.0
    %553 = vmatprep.subr.mxu0 0.0
    %554 = vmatpush1.msra.mxu0 0.0
    %555 = vmatprep.subr.mxu0 0.0
    %556 = vmatpush1.msra.mxu0 0.0
    %557 = vmatprep.subr.mxu0 0.0
    %558 = vmatpush1.msra.mxu0 0.0
    %559 = vmatprep.subr.mxu0 0.0
    %560 = vmatpush1.msra.mxu0 0.0
    %561 = vmatprep.subr.mxu0 0.0
    %562 = vmatpush1.msra.mxu0 0.0
    %563 = vmatprep.subr.mxu0 0.0
    %564 = vmatpush1.msra.mxu0 0.0
    %565 = vmatprep.subr.mxu0 0.0
    %566 = vmatpush1.msra.mxu0 0.0
    %567 = vmatprep.subr.mxu0 0.0
    %568 = vmatpush1.msra.mxu0 0.0
    %569 = vmatprep.subr.mxu0 0.0
    %570 = vmatpush1.msra.mxu0 0.0
    %571 = vmatprep.subr.mxu0 0.0
    %572 = vmatpush1.msra.mxu0 0.0
    %573 = vmatprep.subr.mxu0 0.0
    %574 = vmatpush1.msra.mxu0 0.0
    %575 = vmatprep.subr.mxu0 0.0
    %576 = vmatpush1.msra.mxu0 0.0
    %577 = vmatprep.subr.mxu0 0.0
    %578 = vmatpush1.msra.mxu0 0.0
    %579 = vmatprep.subr.mxu0 0.0
    %580 = vmatpush1.msra.mxu0 0.0
    %581 = vmatprep.subr.mxu0 0.0
    %582 = vmatpush1.msra.mxu0 0.0
    %583 = vmatprep.subr.mxu0 0.0
    %584 = vmatpush1.msra.mxu0 0.0
    %585 = vmatprep.subr.mxu0 0.0
    %586 = vmatpush1.msra.mxu0 0.0
    %587 = vmatprep.subr.mxu0 0.0
    %588 = vmatpush1.msra.mxu0 0.0
    %589 = vmatprep.subr.mxu0 0.0
    %590 = vmatpush1.msra.mxu0 0.0
    %591 = vmatprep.subr.mxu0 0.0
    %592 = vmatpush1.msra.mxu0 0.0
    %593 = vmatprep.subr.mxu0 0.0
    %594 = vmatpush1.msra.mxu0 0.0
    %595 = vmatprep.subr.mxu0 0.0
    %596 = vmatpush1.msra.mxu0 0.0
    %597 = vmatprep.subr.mxu0 0.0
    %598 = vmatpush1.msra.mxu0 0.0
    %599 = vmatprep.subr.mxu0 0.0
    %600 = vmatpush1.msra.mxu0 0.0
    %601 = vmatprep.mubr.f32.mxu0 0.0
    %602 = vmatmul.mubr.f32.gmra.mrb[0].mxu0 %v514
    %v603 = vpop.f32.mrb[0].mxu0
    %v604 = vadd.f32 0.0, %v603
    %v605 = vpop.f32.mrb[0].mxu0
    %606 = vmatprep.mubr.f32.mxu0 0.0
    %607 = vmatmul.mubr.f32.gmra.mrb[0].mxu0 %v517
    %v608 = vpop.f32.mrb[0].mxu0
    %v609 = vadd.f32 0.0, %v608
    %v610 = vpop.f32.mrb[0].mxu0
    %611 = vmatprep.mubr.f32.mxu0 0.0
    %612 = vmatmul.mubr.f32.gmra.mrb[0].mxu0 %v520
    %v613 = vpop.f32.mrb[0].mxu0
    %v614 = vadd.f32 0.0, %v613
    %v615 = vpop.f32.mrb[0].mxu0
    %616 = vmatprep.mubr.f32.mxu0 0.0
    %617 = vmatmul.mubr.f32.gmra.mrb[0].mxu0 %v523
    %v618 = vpop.f32.mrb[0].mxu0
    %v619 = vadd.f32 0.0, %v618
    %v620 = vpop.f32.mrb[0].mxu0
    %621 = vmatprep.mubr.f32.mxu0 0.0
    %622 = vmatmul.mubr.f32.gmra.mrb[0].mxu0 %v526
    %v623 = vpop.f32.mrb[0].mxu0
    %v624 = vadd.f32 0.0, %v623
    %v625 = vpop.f32.mrb[0].mxu0
    %626 = vmatprep.mubr.f32.mxu0 0.0
    %627 = vmatmul.mubr.f32.gmra.mrb[0].mxu0 %v529
    %v628 = vpop.f32.mrb[0].mxu0
    %v629 = vadd.f32 0.0, %v628
    %v630 = vpop.f32.mrb[0].mxu0
    %631 = vmatprep.mubr.f32.mxu0 0.0
    %632 = vmatmul.mubr.f32.gmra.mrb[0].mxu0 %v532
    %v633 = vpop.f32.mrb[0].mxu0
    %v634 = vadd.f32 0.0, %v633
    %v635 = vpop.f32.mrb[0].mxu0
    %636 = vmatprep.mubr.f32.mxu0 0.0
    %637 = vmatmul.mubr.f32.gmra.mrb[0].mxu0 %v535
    %v638 = vpop.f32.mrb[0].mxu0
    %v639 = vadd.f32 0.0, %v638
    %v640 = vpop.f32.mrb[0].mxu0
    %641 = vdwg.mxu0
    %v643 = vsel %vm512, 0.0, 0
    %645 = vmatprep.subr.mxu0 0.0
    %646 = vmatpush1.msra.mxu0 %v503
    %647 = vmatprep.subr.mxu0 0.0
    %648 = vmatpush1.msra.mxu0 %v504
    %649 = vmatprep.subr.mxu0 0.0
    %650 = vmatpush1.msra.mxu0 %v505
    %651 = vmatprep.subr.mxu0 0.0
    %652 = vmatpush1.msra.mxu0 %v506
    %653 = vmatprep.subr.mxu0 0.0
    %654 = vmatpush1.msra.mxu0 0.0
    %655 = vmatprep.subr.mxu0 0.0
    %656 = vmatpush1.msra.mxu0 0.0
    %657 = vmatprep.subr.mxu0 0.0
    %658 = vmatpush1.msra.mxu0 0.0
    %659 = vmatprep.subr.mxu0 0.0
    %660 = vmatpush1.msra.mxu0 0.0
    %661 = vmatprep.subr.mxu0 0.0
    %662 = vmatpush1.msra.mxu0 0.0
    %663 = vmatprep.subr.mxu0 0.0
    %664 = vmatpush1.msra.mxu0 0.0
    %665 = vmatprep.subr.mxu0 0.0
    %666 = vmatpush1.msra.mxu0 0.0
    %667 = vmatprep.subr.mxu0 0.0
    %668 = vmatpush1.msra.mxu0 0.0
    %669 = vmatprep.subr.mxu0 0.0
    %670 = vmatpush1.msra.mxu0 0.0
    %671 = vmatprep.subr.mxu0 0.0
    %672 = vmatpush1.msra.mxu0 0.0
    %673 = vmatprep.subr.mxu0 0.0
    %674 = vmatpush1.msra.mxu0 0.0
    %675 = vmatprep.subr.mxu0 0.0
    %676 = vmatpush1.msra.mxu0 0.0
    %677 = vmatprep.subr.mxu0 0.0
    %678 = vmatpush1.msra.mxu0 0.0
    %679 = vmatprep.subr.mxu0 0.0
    %680 = vmatpush1.msra.mxu0 0.0
    %681 = vmatprep.subr.mxu0 0.0
    %682 = vmatpush1.msra.mxu0 0.0
    %683 = vmatprep.subr.mxu0 0.0
    %684 = vmatpush1.msra.mxu0 0.0
    %685 = vmatprep.subr.mxu0 0.0
    %686 = vmatpush1.msra.mxu0 0.0
    %687 = vmatprep.subr.mxu0 0.0
    %688 = vmatpush1.msra.mxu0 0.0
    %689 = vmatprep.subr.mxu0 0.0
    %690 = vmatpush1.msra.mxu0 0.0
    %691 = vmatprep.subr.mxu0 0.0
    %692 = vmatpush1.msra.mxu0 0.0
    %693 = vmatprep.subr.mxu0 0.0
    %694 = vmatpush1.msra.mxu0 0.0
    %695 = vmatprep.subr.mxu0 0.0
    %696 = vmatpush1.msra.mxu0 0.0
    %697 = vmatprep.subr.mxu0 0.0
    %698 = vmatpush1.msra.mxu0 0.0
    %699 = vmatprep.subr.mxu0 0.0
    %700 = vmatpush1.msra.mxu0 0.0
    %701 = vmatprep.subr.mxu0 0.0
    %702 = vmatpush1.msra.mxu0 0.0
    %703 = vmatprep.subr.mxu0 0.0
    %704 = vmatpush1.msra.mxu0 0.0
    %705 = vmatprep.subr.mxu0 0.0
    %706 = vmatpush1.msra.mxu0 0.0
    %707 = vmatprep.subr.mxu0 0.0
    %708 = vmatpush1.msra.mxu0 0.0
    %709 = vmatprep.mubr.f32.mxu0 0.0
    %710 = vmatmul.mubr.f32.gmra.mrb[0].mxu0 %v643
    %v711 = vpop.f32.mrb[0].mxu0
    %v712 = vadd.f32 %v604, %v711
    %v713 = vpop.f32.mrb[0].mxu0
    %714 = vmatprep.mubr.f32.mxu0 0.0
    %715 = vmatmul.mubr.f32.gmra.mrb[0].mxu0 %v514
    %v716 = vpop.f32.mrb[0].mxu0
    %v717 = vadd.f32 %v609, %v716
    %v718 = vpop.f32.mrb[0].mxu0
    %719 = vmatprep.mubr.f32.mxu0 0.0
    %720 = vmatmul.mubr.f32.gmra.mrb[0].mxu0 %v517
    %v721 = vpop.f32.mrb[0].mxu0
    %v722 = vadd.f32 %v614, %v721
    %v723 = vpop.f32.mrb[0].mxu0
    %724 = vmatprep.mubr.f32.mxu0 0.0
    %725 = vmatmul.mubr.f32.gmra.mrb[0].mxu0 %v520
    %v726 = vpop.f32.mrb[0].mxu0
    %v727 = vadd.f32 %v619, %v726
    %v728 = vpop.f32.mrb[0].mxu0
    %729 = vmatprep.mubr.f32.mxu0 0.0
    %730 = vmatmul.mubr.f32.gmra.mrb[0].mxu0 %v523
    %v731 = vpop.f32.mrb[0].mxu0
    %v732 = vadd.f32 %v624, %v731
    %v733 = vpop.f32.mrb[0].mxu0
    %734 = vmatprep.mubr.f32.mxu0 0.0
    %735 = vmatmul.mubr.f32.gmra.mrb[0].mxu0 %v526
    %v736 = vpop.f32.mrb[0].mxu0
    %v737 = vadd.f32 %v629, %v736
    %v738 = vpop.f32.mrb[0].mxu0
    %739 = vmatprep.mubr.f32.mxu0 0.0
    %740 = vmatmul.mubr.f32.gmra.mrb[0].mxu0 %v529
    %v741 = vpop.f32.mrb[0].mxu0
    %v742 = vadd.f32 %v634, %v741
    %v743 = vpop.f32.mrb[0].mxu0
    %744 = vmatprep.mubr.f32.mxu0 0.0
    %745 = vmatmul.mubr.f32.gmra.mrb[0].mxu0 %v532
    %v746 = vpop.f32.mrb[0].mxu0
    %v747 = vadd.f32 %v639, %v746
    %v748 = vpop.f32.mrb[0].mxu0
    %749 = vdwg.mxu0
    %s750 = scalar_lea.vmem %s3, 64
    %v751 = vld [vmem:[%s750] sm:$0xff]
    %v752 = vld [vmem:[%s750 + $0x8] sm:$0xff]
    %v753 = vld [vmem:[%s750 + $0x10] sm:$0xff]
    %v754 = vld [vmem:[%s750 + $0x18] sm:$0xff]
    %755 = vmatprep.subr.mxu0 0.0
    %756 = vmatpush1.msra.mxu0 %v751
    %757 = vmatprep.subr.mxu0 0.0
    %758 = vmatpush1.msra.mxu0 %v752
    %759 = vmatprep.subr.mxu0 0.0
    %760 = vmatpush1.msra.mxu0 %v753
    %761 = vmatprep.subr.mxu0 0.0
    %762 = vmatpush1.msra.mxu0 %v754
    %763 = vmatprep.subr.mxu0 0.0
    %764 = vmatpush1.msra.mxu0 0.0
    %765 = vmatprep.subr.mxu0 0.0
    %766 = vmatpush1.msra.mxu0 0.0
    %767 = vmatprep.subr.mxu0 0.0
    %768 = vmatpush1.msra.mxu0 0.0
    %769 = vmatprep.subr.mxu0 0.0
    %770 = vmatpush1.msra.mxu0 0.0
    %771 = vmatprep.subr.mxu0 0.0
    %772 = vmatpush1.msra.mxu0 0.0
    %773 = vmatprep.subr.mxu0 0.0
    %774 = vmatpush1.msra.mxu0 0.0
    %775 = vmatprep.subr.mxu0 0.0
    %776 = vmatpush1.msra.mxu0 0.0
    %777 = vmatprep.subr.mxu0 0.0
    %778 = vmatpush1.msra.mxu0 0.0
    %779 = vmatprep.subr.mxu0 0.0
    %780 = vmatpush1.msra.mxu0 0.0
    %781 = vmatprep.subr.mxu0 0.0
    %782 = vmatpush1.msra.mxu0 0.0
    %783 = vmatprep.subr.mxu0 0.0
    %784 = vmatpush1.msra.mxu0 0.0
    %785 = vmatprep.subr.mxu0 0.0
    %786 = vmatpush1.msra.mxu0 0.0
    %787 = vmatprep.subr.mxu0 0.0
    %788 = vmatpush1.msra.mxu0 0.0
    %789 = vmatprep.subr.mxu0 0.0
    %790 = vmatpush1.msra.mxu0 0.0
    %791 = vmatprep.subr.mxu0 0.0
    %792 = vmatpush1.msra.mxu0 0.0
    %793 = vmatprep.subr.mxu0 0.0
    %794 = vmatpush1.msra.mxu0 0.0
    %795 = vmatprep.subr.mxu0 0.0
    %796 = vmatpush1.msra.mxu0 0.0
    %797 = vmatprep.subr.mxu0 0.0
    %798 = vmatpush1.msra.mxu0 0.0
    %799 = vmatprep.subr.mxu0 0.0
    %800 = vmatpush1.msra.mxu0 0.0
    %801 = vmatprep.subr.mxu0 0.0
    %802 = vmatpush1.msra.mxu0 0.0
    %803 = vmatprep.subr.mxu0 0.0
    %804 = vmatpush1.msra.mxu0 0.0
    %805 = vmatprep.subr.mxu0 0.0
    %806 = vmatpush1.msra.mxu0 0.0
    %807 = vmatprep.subr.mxu0 0.0
    %808 = vmatpush1.msra.mxu0 0.0
    %809 = vmatprep.subr.mxu0 0.0
    %810 = vmatpush1.msra.mxu0 0.0
    %811 = vmatprep.subr.mxu0 0.0
    %812 = vmatpush1.msra.mxu0 0.0
    %813 = vmatprep.subr.mxu0 0.0
    %814 = vmatpush1.msra.mxu0 0.0
    %815 = vmatprep.subr.mxu0 0.0
    %816 = vmatpush1.msra.mxu0 0.0
    %817 = vmatprep.subr.mxu0 0.0
    %818 = vmatpush1.msra.mxu0 0.0
    %819 = vmatprep.mubr.f32.mxu0 0.0
    %820 = vmatmul.mubr.f32.gmra.mrb[0].mxu0 %v517
    %v821 = vpop.f32.mrb[0].mxu0
    %v822 = vadd.f32 0.0, %v821
    %v823 = vpop.f32.mrb[0].mxu0
    %824 = vmatprep.mubr.f32.mxu0 0.0
    %825 = vmatmul.mubr.f32.gmra.mrb[0].mxu0 %v520
    %v826 = vpop.f32.mrb[0].mxu0
    %v827 = vadd.f32 0.0, %v826
    %v828 = vpop.f32.mrb[0].mxu0
    %829 = vmatprep.mubr.f32.mxu0 0.0
    %830 = vmatmul.mubr.f32.gmra.mrb[0].mxu0 %v523
    %v831 = vpop.f32.mrb[0].mxu0
    %v832 = vadd.f32 0.0, %v831
    %v833 = vpop.f32.mrb[0].mxu0
    %834 = vmatprep.mubr.f32.mxu0 0.0
    %835 = vmatmul.mubr.f32.gmra.mrb[0].mxu0 %v526
    %v836 = vpop.f32.mrb[0].mxu0
    %v837 = vadd.f32 0.0, %v836
    %v838 = vpop.f32.mrb[0].mxu0
    %839 = vmatprep.mubr.f32.mxu0 0.0
    %840 = vmatmul.mubr.f32.gmra.mrb[0].mxu0 %v529
    %v841 = vpop.f32.mrb[0].mxu0
    %v842 = vadd.f32 0.0, %v841
    %v843 = vpop.f32.mrb[0].mxu0
    %844 = vmatprep.mubr.f32.mxu0 0.0
    %845 = vmatmul.mubr.f32.gmra.mrb[0].mxu0 %v532
    %v846 = vpop.f32.mrb[0].mxu0
    %v847 = vadd.f32 0.0, %v846
    %v848 = vpop.f32.mrb[0].mxu0
    %849 = vmatprep.mubr.f32.mxu0 0.0
    %850 = vmatmul.mubr.f32.gmra.mrb[0].mxu0 %v535
    %v851 = vpop.f32.mrb[0].mxu0
    %v852 = vadd.f32 0.0, %v851
    %v853 = vpop.f32.mrb[0].mxu0
    %854 = vmatprep.mubr.f32.mxu0 0.0
    %855 = vmatmul.mubr.f32.gmra.mrb[0].mxu0 %v643
    %v856 = vpop.f32.mrb[0].mxu0
    %v857 = vadd.f32 0.0, %v856
    %v858 = vpop.f32.mrb[0].mxu0
    %859 = vdwg.mxu0
    %v860 = vadd.f32 %v712, %v822
    %v861 = vadd.f32 %v717, %v827
    %v862 = vadd.f32 %v722, %v832
    %v863 = vadd.f32 %v727, %v837
    %v864 = vadd.f32 %v732, %v842
    %v865 = vadd.f32 %v737, %v847
    %v866 = vadd.f32 %v742, %v852
    %v867 = vadd.f32 %v747, %v857
    %v868 = vld [vmem:[%s4] sm:$0x1]
    %v870 = vlaneseq
    %v871 = vshrl.u32 %v870, 7
    %v872 = vsub.s32 0, %v871
    %v873 = vrot.slane %v868, %v872
    %v875 = vadd.f32 %v860, %v873
    %v876 = vadd.f32 %v861, %v873
    %v877 = vadd.f32 %v862, %v873
    %v878 = vadd.f32 %v863, %v873
    %v879 = vadd.f32 %v864, %v873
    %v880 = vadd.f32 %v865, %v873
    %v881 = vadd.f32 %v866, %v873
    %v882 = vadd.f32 %v867, %v873
    %v883 = vmax.f32 %v875, 0.0
    %v884 = vmax.f32 %v876, 0.0
    %v885 = vmax.f32 %v877, 0.0
    %v886 = vmax.f32 %v878, 0.0
    %v887 = vmax.f32 %v879, 0.0
    %v888 = vmax.f32 %v880, 0.0
    %v889 = vmax.f32 %v881, 0.0
    %v890 = vmax.f32 %v882, 0.0
    %v891 = vld [vmem:[%s6] sm:$0xff]
    %v892 = vld [vmem:[%s6 + $0x8] sm:$0xff]
    %v893 = vld [vmem:[%s6 + $0x10] sm:$0xff]
    %v894 = vld [vmem:[%s6 + $0x18] sm:$0xff]
    %v895 = vld [vmem:[%s8] sm:$0x1]
    %v897 = vlaneseq
    %v898 = vshrl.u32 %v897, 7
    %v899 = vsub.s32 0, %v898
    %v900 = vrot.slane %v895, %v899
    %v903 = vsel %vm512, %v883, 0
    %v906 = vsel %vm512, %v884, 0
    %v909 = vsel %vm512, %v885, 0
    %v912 = vsel %vm512, %v886, 0
    %v915 = vsel %vm512, %v887, 0
    %v918 = vsel %vm512, %v888, 0
    %v921 = vsel %vm512, %v889, 0
    %v924 = vsel %vm512, %v890, 0
    %926 = vmatprep.subr.mxu0 0.0
    %927 = vmatpush1.msra.mxu0 %v891
    %928 = vmatprep.subr.mxu0 0.0
    %929 = vmatpush1.msra.mxu0 %v892
    %930 = vmatprep.subr.mxu0 0.0
    %931 = vmatpush1.msra.mxu0 %v893
    %932 = vmatprep.subr.mxu0 0.0
    %933 = vmatpush1.msra.mxu0 %v894
    %934 = vmatprep.subr.mxu0 0.0
    %935 = vmatpush1.msra.mxu0 0.0
    %936 = vmatprep.subr.mxu0 0.0
    %937 = vmatpush1.msra.mxu0 0.0
    %938 = vmatprep.subr.mxu0 0.0
    %939 = vmatpush1.msra.mxu0 0.0
    %940 = vmatprep.subr.mxu0 0.0
    %941 = vmatpush1.msra.mxu0 0.0
    %942 = vmatprep.subr.mxu0 0.0
    %943 = vmatpush1.msra.mxu0 0.0
    %944 = vmatprep.subr.mxu0 0.0
    %945 = vmatpush1.msra.mxu0 0.0
    %946 = vmatprep.subr.mxu0 0.0
    %947 = vmatpush1.msra.mxu0 0.0
    %948 = vmatprep.subr.mxu0 0.0
    %949 = vmatpush1.msra.mxu0 0.0
    %950 = vmatprep.subr.mxu0 0.0
    %951 = vmatpush1.msra.mxu0 0.0
    %952 = vmatprep.subr.mxu0 0.0
    %953 = vmatpush1.msra.mxu0 0.0
    %954 = vmatprep.subr.mxu0 0.0
    %955 = vmatpush1.msra.mxu0 0.0
    %956 = vmatprep.subr.mxu0 0.0
    %957 = vmatpush1.msra.mxu0 0.0
    %958 = vmatprep.subr.mxu0 0.0
    %959 = vmatpush1.msra.mxu0 0.0
    %960 = vmatprep.subr.mxu0 0.0
    %961 = vmatpush1.msra.mxu0 0.0
    %962 = vmatprep.subr.mxu0 0.0
    %963 = vmatpush1.msra.mxu0 0.0
    %964 = vmatprep.subr.mxu0 0.0
    %965 = vmatpush1.msra.mxu0 0.0
    %966 = vmatprep.subr.mxu0 0.0
    %967 = vmatpush1.msra.mxu0 0.0
    %968 = vmatprep.subr.mxu0 0.0
    %969 = vmatpush1.msra.mxu0 0.0
    %970 = vmatprep.subr.mxu0 0.0
    %971 = vmatpush1.msra.mxu0 0.0
    %972 = vmatprep.subr.mxu0 0.0
    %973 = vmatpush1.msra.mxu0 0.0
    %974 = vmatprep.subr.mxu0 0.0
    %975 = vmatpush1.msra.mxu0 0.0
    %976 = vmatprep.subr.mxu0 0.0
    %977 = vmatpush1.msra.mxu0 0.0
    %978 = vmatprep.subr.mxu0 0.0
    %979 = vmatpush1.msra.mxu0 0.0
    %980 = vmatprep.subr.mxu0 0.0
    %981 = vmatpush1.msra.mxu0 0.0
    %982 = vmatprep.subr.mxu0 0.0
    %983 = vmatpush1.msra.mxu0 0.0
    %984 = vmatprep.subr.mxu0 0.0
    %985 = vmatpush1.msra.mxu0 0.0
    %986 = vmatprep.subr.mxu0 0.0
    %987 = vmatpush1.msra.mxu0 0.0
    %988 = vmatprep.subr.mxu0 0.0
    %989 = vmatpush1.msra.mxu0 0.0
    %990 = vmatprep.mubr.f32.mxu0 0.0
    %991 = vmatmul.mubr.f32.gmra.mrb[0].mxu0 %v903
    %v992 = vpop.f32.mrb[0].mxu0
    %v993 = vadd.f32 %v900, %v992
    %v994 = vpop.f32.mrb[0].mxu0
    %995 = vmatprep.mubr.f32.mxu0 0.0
    %996 = vmatmul.mubr.f32.gmra.mrb[0].mxu0 %v906
    %v997 = vpop.f32.mrb[0].mxu0
    %v998 = vadd.f32 %v900, %v997
    %v999 = vpop.f32.mrb[0].mxu0
    %1000 = vmatprep.mubr.f32.mxu0 0.0
    %1001 = vmatmul.mubr.f32.gmra.mrb[0].mxu0 %v909
    %v1002 = vpop.f32.mrb[0].mxu0
    %v1003 = vadd.f32 %v900, %v1002
    %v1004 = vpop.f32.mrb[0].mxu0
    %1005 = vmatprep.mubr.f32.mxu0 0.0
    %1006 = vmatmul.mubr.f32.gmra.mrb[0].mxu0 %v912
    %v1007 = vpop.f32.mrb[0].mxu0
    %v1008 = vadd.f32 %v900, %v1007
    %v1009 = vpop.f32.mrb[0].mxu0
    %1010 = vmatprep.mubr.f32.mxu0 0.0
    %1011 = vmatmul.mubr.f32.gmra.mrb[0].mxu0 %v915
    %v1012 = vpop.f32.mrb[0].mxu0
    %v1013 = vadd.f32 %v900, %v1012
    %v1014 = vpop.f32.mrb[0].mxu0
    %1015 = vmatprep.mubr.f32.mxu0 0.0
    %1016 = vmatmul.mubr.f32.gmra.mrb[0].mxu0 %v918
    %v1017 = vpop.f32.mrb[0].mxu0
    %v1018 = vadd.f32 %v900, %v1017
    %v1019 = vpop.f32.mrb[0].mxu0
    %1020 = vmatprep.mubr.f32.mxu0 0.0
    %1021 = vmatmul.mubr.f32.gmra.mrb[0].mxu0 %v921
    %v1022 = vpop.f32.mrb[0].mxu0
    %v1023 = vadd.f32 %v900, %v1022
    %v1024 = vpop.f32.mrb[0].mxu0
    %1025 = vmatprep.mubr.f32.mxu0 0.0
    %1026 = vmatmul.mubr.f32.gmra.mrb[0].mxu0 %v924
    %v1027 = vpop.f32.mrb[0].mxu0
    %v1028 = vadd.f32 %v900, %v1027
    %v1029 = vpop.f32.mrb[0].mxu0
    %1030 = vdwg.mxu0
    %vm1031 = vcmask 785408
    %1032 = vst.msk [vmem:[#allocation2] sm:$0xff] %vm1031, %v993
    %1033 = vst.msk [vmem:[#allocation2 + $0x8] sm:$0xff] %vm1031, %v998
    %1034 = vst.msk [vmem:[#allocation2 + $0x10] sm:$0xff] %vm1031, %v1003
    %1035 = vst.msk [vmem:[#allocation2 + $0x18] sm:$0xff] %vm1031, %v1008
    %1036 = vst.msk [vmem:[#allocation2 + $0x20] sm:$0xff] %vm1031, %v1013
    %1037 = vst.msk [vmem:[#allocation2 + $0x28] sm:$0xff] %vm1031, %v1018
    %1038 = vst.msk [vmem:[#allocation2 + $0x30] sm:$0xff] %vm1031, %v1023
    %1039 = vst.msk [vmem:[#allocation2 + $0x38] sm:$0xff] %vm1031, %v1028
    %v1040 = vld [vmem:[%s7] sm:$0xff]
    %v1041 = vld [vmem:[%s7 + $0x8] sm:$0xff]
    %v1042 = vld [vmem:[%s7 + $0x10] sm:$0xff]
    %v1043 = vld [vmem:[%s7 + $0x18] sm:$0xff]
    %v1044 = vld [vmem:[%s9] sm:$0x1]
    %v1045 = vld [vmem:[%s5] sm:$0xff]
    %v1046 = vld [vmem:[#allocation2] sm:$0xff]
    %v1048 = vlaneseq
    %v1049 = vshrl.u32 %v1048, 7
    %v1050 = vsub.s32 0, %v1049
    %v1051 = vrot.slane %v1044, %v1050
    %v1054 = vsel %vm512, %v1045, 0
    %1056 = vmatprep.subr.mxu0 0.0
    %1057 = vmatpush1.msra.mxu0 %v1040
    %1058 = vmatprep.subr.mxu0 0.0
    %1059 = vmatpush1.msra.mxu0 %v1041
    %1060 = vmatprep.subr.mxu0 0.0
    %1061 = vmatpush1.msra.mxu0 %v1042
    %1062 = vmatprep.subr.mxu0 0.0
    %1063 = vmatpush1.msra.mxu0 %v1043
    %1064 = vmatprep.subr.mxu0 0.0
    %1065 = vmatpush1.msra.mxu0 0.0
    %1066 = vmatprep.subr.mxu0 0.0
    %1067 = vmatpush1.msra.mxu0 0.0
    %1068 = vmatprep.subr.mxu0 0.0
    %1069 = vmatpush1.msra.mxu0 0.0
    %1070 = vmatprep.subr.mxu0 0.0
    %1071 = vmatpush1.msra.mxu0 0.0
    %1072 = vmatprep.subr.mxu0 0.0
    %1073 = vmatpush1.msra.mxu0 0.0
    %1074 = vmatprep.subr.mxu0 0.0
    %1075 = vmatpush1.msra.mxu0 0.0
    %1076 = vmatprep.subr.mxu0 0.0
    %1077 = vmatpush1.msra.mxu0 0.0
    %1078 = vmatprep.subr.mxu0 0.0
    %1079 = vmatpush1.msra.mxu0 0.0
    %1080 = vmatprep.subr.mxu0 0.0
    %1081 = vmatpush1.msra.mxu0 0.0
    %1082 = vmatprep.subr.mxu0 0.0
    %1083 = vmatpush1.msra.mxu0 0.0
    %1084 = vmatprep.subr.mxu0 0.0
    %1085 = vmatpush1.msra.mxu0 0.0
    %1086 = vmatprep.subr.mxu0 0.0
    %1087 = vmatpush1.msra.mxu0 0.0
    %1088 = vmatprep.subr.mxu0 0.0
    %1089 = vmatpush1.msra.mxu0 0.0
    %1090 = vmatprep.subr.mxu0 0.0
    %1091 = vmatpush1.msra.mxu0 0.0
    %1092 = vmatprep.subr.mxu0 0.0
    %1093 = vmatpush1.msra.mxu0 0.0
    %1094 = vmatprep.subr.mxu0 0.0
    %1095 = vmatpush1.msra.mxu0 0.0
    %1096 = vmatprep.subr.mxu0 0.0
    %1097 = vmatpush1.msra.mxu0 0.0
    %1098 = vmatprep.subr.mxu0 0.0
    %1099 = vmatpush1.msra.mxu0 0.0
    %1100 = vmatprep.subr.mxu0 0.0
    %1101 = vmatpush1.msra.mxu0 0.0
    %1102 = vmatprep.subr.mxu0 0.0
    %1103 = vmatpush1.msra.mxu0 0.0
    %1104 = vmatprep.subr.mxu0 0.0
    %1105 = vmatpush1.msra.mxu0 0.0
    %1106 = vmatprep.subr.mxu0 0.0
    %1107 = vmatpush1.msra.mxu0 0.0
    %1108 = vmatprep.subr.mxu0 0.0
    %1109 = vmatpush1.msra.mxu0 0.0
    %1110 = vmatprep.subr.mxu0 0.0
    %1111 = vmatpush1.msra.mxu0 0.0
    %1112 = vmatprep.subr.mxu0 0.0
    %1113 = vmatpush1.msra.mxu0 0.0
    %1114 = vmatprep.subr.mxu0 0.0
    %1115 = vmatpush1.msra.mxu0 0.0
    %1116 = vmatprep.subr.mxu0 0.0
    %1117 = vmatpush1.msra.mxu0 0.0
    %1118 = vmatprep.subr.mxu0 0.0
    %1119 = vmatpush1.msra.mxu0 0.0
    %1120 = vmatprep.mubr.f32.mxu0 0.0
    %1121 = vmatmul.mubr.f32.gmra.mrb[0].mxu0 %v1054
    %v1122 = vpop.f32.mrb[0].mxu0
    %v1123 = vadd.f32 %v1051, %v1122
    %v1124 = vpop.f32.mrb[0].mxu0
    %1125 = vdwg.mxu0
    %v1126 = vadd.f32 %v1046, %v1123
    %v1127 = vxor.u32 %v1126, 2147483648
    %v1128 = vmul.f32 %v1127, 1.442695
    %v1129 = vpow.pop %v1128
    %v1130 = vadd.f32 %v1129, 1.0
    %v1131 = vrcp.pop %v1130
    %v1132 = vmul.f32 1.0, %v1131
    %1134 = vrot.lane.b32.xlu0 %v1123, 64
    %v1135 = vpop.permute.xlu0 %1134
    %v1137 = vmul.f32 %v1132, %v1135
    %1139 = vrot.lane.b32.xlu0 %v1137, 64
    %v1140 = vpop.permute.xlu0 %1139
    %v1142 = vadd.f32 %v1046, %v1140
    %v1143 = vtanh.pop %v1142
    %v1144 = vsub.f32 1.0, %v1132
    %1146 = vrot.lane.b32.xlu0 %v1143, 96
    %v1147 = vpop.permute.xlu0 %1146
    %v1149 = vmul.f32 %v1144, %v1147
    %1150 = vrot.lane.b32.xlu0 %v1045, 32
    %v1151 = vpop.permute.xlu0 %1150
    %v1153 = vmul.f32 %v1132, %v1151
    %v1154 = vadd.f32 %v1149, %v1153
    %1156 = vrot.lane.b32.xlu0 %v1154, 96
    %v1157 = vpop.permute.xlu0 %1156
    %1159 = vst.msk [vmem:[#allocation3] sm:$0xff] %vm512, %v1157
    %s1160 = scalar_lea.vmem [#allocation2], 8
    %v1161 = vld [vmem:[%s1160] sm:$0xff]
    %v1162 = vsel %vm512, %v1157, 0
    %1164 = vmatprep.subr.mxu0 0.0
    %1165 = vmatpush1.msra.mxu0 %v1040
    %1166 = vmatprep.subr.mxu0 0.0
    %1167 = vmatpush1.msra.mxu0 %v1041
    %1168 = vmatprep.subr.mxu0 0.0
    %1169 = vmatpush1.msra.mxu0 %v1042
    %1170 = vmatprep.subr.mxu0 0.0
    %1171 = vmatpush1.msra.mxu0 %v1043
    %1172 = vmatprep.subr.mxu0 0.0
    %1173 = vmatpush1.msra.mxu0 0.0
    %1174 = vmatprep.subr.mxu0 0.0
    %1175 = vmatpush1.msra.mxu0 0.0
    %1176 = vmatprep.subr.mxu0 0.0
    %1177 = vmatpush1.msra.mxu0 0.0
    %1178 = vmatprep.subr.mxu0 0.0
    %1179 = vmatpush1.msra.mxu0 0.0
    %1180 = vmatprep.subr.mxu0 0.0
    %1181 = vmatpush1.msra.mxu0 0.0
    %1182 = vmatprep.subr.mxu0 0.0
    %1183 = vmatpush1.msra.mxu0 0.0
    %1184 = vmatprep.subr.mxu0 0.0
    %1185 = vmatpush1.msra.mxu0 0.0
    %1186 = vmatprep.subr.mxu0 0.0
    %1187 = vmatpush1.msra.mxu0 0.0
    %1188 = vmatprep.subr.mxu0 0.0
    %1189 = vmatpush1.msra.mxu0 0.0
    %1190 = vmatprep.subr.mxu0 0.0
    %1191 = vmatpush1.msra.mxu0 0.0
    %1192 = vmatprep.subr.mxu0 0.0
    %1193 = vmatpush1.msra.mxu0 0.0
    %1194 = vmatprep.subr.mxu0 0.0
    %1195 = vmatpush1.msra.mxu0 0.0
    %1196 = vmatprep.subr.mxu0 0.0
    %1197 = vmatpush1.msra.mxu0 0.0
    %1198 = vmatprep.subr.mxu0 0.0
    %1199 = vmatpush1.msra.mxu0 0.0
    %1200 = vmatprep.subr.mxu0 0.0
    %1201 = vmatpush1.msra.mxu0 0.0
    %1202 = vmatprep.subr.mxu0 0.0
    %1203 = vmatpush1.msra.mxu0 0.0
    %1204 = vmatprep.subr.mxu0 0.0
    %1205 = vmatpush1.msra.mxu0 0.0
    %1206 = vmatprep.subr.mxu0 0.0
    %1207 = vmatpush1.msra.mxu0 0.0
    %1208 = vmatprep.subr.mxu0 0.0
    %1209 = vmatpush1.msra.mxu0 0.0
    %1210 = vmatprep.subr.mxu0 0.0
    %1211 = vmatpush1.msra.mxu0 0.0
    %1212 = vmatprep.subr.mxu0 0.0
    %1213 = vmatpush1.msra.mxu0 0.0
    %1214 = vmatprep.subr.mxu0 0.0
    %1215 = vmatpush1.msra.mxu0 0.0
    %1216 = vmatprep.subr.mxu0 0.0
    %1217 = vmatpush1.msra.mxu0 0.0
    %1218 = vmatprep.subr.mxu0 0.0
    %1219 = vmatpush1.msra.mxu0 0.0
    %1220 = vmatprep.subr.mxu0 0.0
    %1221 = vmatpush1.msra.mxu0 0.0
    %1222 = vmatprep.subr.mxu0 0.0
    %1223 = vmatpush1.msra.mxu0 0.0
    %1224 = vmatprep.subr.mxu0 0.0
    %1225 = vmatpush1.msra.mxu0 0.0
    %1226 = vmatprep.subr.mxu0 0.0
    %1227 = vmatpush1.msra.mxu0 0.0
    %1228 = vmatprep.mubr.f32.mxu0 0.0
    %1229 = vmatmul.mubr.f32.gmra.mrb[0].mxu0 %v1162
    %v1230 = vpop.f32.mrb[0].mxu0
    %v1231 = vadd.f32 %v1051, %v1230
    %v1232 = vpop.f32.mrb[0].mxu0
    %1233 = vdwg.mxu0
    %v1234 = vadd.f32 %v1161, %v1231
    %v1235 = vxor.u32 %v1234, 2147483648
    %v1236 = vmul.f32 %v1235, 1.442695
    %v1237 = vpow.pop %v1236
    %v1238 = vadd.f32 %v1237, 1.0
    %v1239 = vrcp.pop %v1238
    %v1240 = vmul.f32 1.0, %v1239
    %1242 = vrot.lane.b32.xlu0 %v1231, 64
    %v1243 = vpop.permute.xlu0 %1242
    %v1245 = vmul.f32 %v1240, %v1243
    %1247 = vrot.lane.b32.xlu0 %v1245, 64
    %v1248 = vpop.permute.xlu0 %1247
    %v1250 = vadd.f32 %v1161, %v1248
    %v1251 = vtanh.pop %v1250
    %v1252 = vsub.f32 1.0, %v1240
    %1254 = vrot.lane.b32.xlu0 %v1251, 96
    %v1255 = vpop.permute.xlu0 %1254
    %v1257 = vmul.f32 %v1252, %v1255
    %v1258 = vmul.f32 %v1240, %v1154
    %v1259 = vadd.f32 %v1257, %v1258
    %1261 = vrot.lane.b32.xlu0 %v1259, 96
    %v1262 = vpop.permute.xlu0 %1261
    %s1264 = scalar_lea.vmem [#allocation3], 8
    %1265 = vst.msk [vmem:[%s1264] sm:$0xff] %vm512, %v1262
    %s1266 = scalar_lea.vmem [#allocation2], 16
    %v1267 = vld [vmem:[%s1266] sm:$0xff]
    %v1268 = vsel %vm512, %v1262, 0
    %1270 = vmatprep.subr.mxu0 0.0
    %1271 = vmatpush1.msra.mxu0 %v1040
    %1272 = vmatprep.subr.mxu0 0.0
    %1273 = vmatpush1.msra.mxu0 %v1041
    %1274 = vmatprep.subr.mxu0 0.0
    %1275 = vmatpush1.msra.mxu0 %v1042
    %1276 = vmatprep.subr.mxu0 0.0
    %1277 = vmatpush1.msra.mxu0 %v1043
    %1278 = vmatprep.subr.mxu0 0.0
    %1279 = vmatpush1.msra.mxu0 0.0
    %1280 = vmatprep.subr.mxu0 0.0
    %1281 = vmatpush1.msra.mxu0 0.0
    %1282 = vmatprep.subr.mxu0 0.0
    %1283 = vmatpush1.msra.mxu0 0.0
    %1284 = vmatprep.subr.mxu0 0.0
    %1285 = vmatpush1.msra.mxu0 0.0
    %1286 = vmatprep.subr.mxu0 0.0
    %1287 = vmatpush1.msra.mxu0 0.0
    %1288 = vmatprep.subr.mxu0 0.0
    %1289 = vmatpush1.msra.mxu0 0.0
    %1290 = vmatprep.subr.mxu0 0.0
    %1291 = vmatpush1.msra.mxu0 0.0
    %1292 = vmatprep.subr.mxu0 0.0
    %1293 = vmatpush1.msra.mxu0 0.0
    %1294 = vmatprep.subr.mxu0 0.0
    %1295 = vmatpush1.msra.mxu0 0.0
    %1296 = vmatprep.subr.mxu0 0.0
    %1297 = vmatpush1.msra.mxu0 0.0
    %1298 = vmatprep.subr.mxu0 0.0
    %1299 = vmatpush1.msra.mxu0 0.0
    %1300 = vmatprep.subr.mxu0 0.0
    %1301 = vmatpush1.msra.mxu0 0.0
    %1302 = vmatprep.subr.mxu0 0.0
    %1303 = vmatpush1.msra.mxu0 0.0
    %1304 = vmatprep.subr.mxu0 0.0
    %1305 = vmatpush1.msra.mxu0 0.0
    %1306 = vmatprep.subr.mxu0 0.0
    %1307 = vmatpush1.msra.mxu0 0.0
    %1308 = vmatprep.subr.mxu0 0.0
    %1309 = vmatpush1.msra.mxu0 0.0
    %1310 = vmatprep.subr.mxu0 0.0
    %1311 = vmatpush1.msra.mxu0 0.0
    %1312 = vmatprep.subr.mxu0 0.0
    %1313 = vmatpush1.msra.mxu0 0.0
    %1314 = vmatprep.subr.mxu0 0.0
    %1315 = vmatpush1.msra.mxu0 0.0
    %1316 = vmatprep.subr.mxu0 0.0
    %1317 = vmatpush1.msra.mxu0 0.0
    %1318 = vmatprep.subr.mxu0 0.0
    %1319 = vmatpush1.msra.mxu0 0.0
    %1320 = vmatprep.subr.mxu0 0.0
    %1321 = vmatpush1.msra.mxu0 0.0
    %1322 = vmatprep.subr.mxu0 0.0
    %1323 = vmatpush1.msra.mxu0 0.0
    %1324 = vmatprep.subr.mxu0 0.0
    %1325 = vmatpush1.msra.mxu0 0.0
    %1326 = vmatprep.subr.mxu0 0.0
    %1327 = vmatpush1.msra.mxu0 0.0
    %1328 = vmatprep.subr.mxu0 0.0
    %1329 = vmatpush1.msra.mxu0 0.0
    %1330 = vmatprep.subr.mxu0 0.0
    %1331 = vmatpush1.msra.mxu0 0.0
    %1332 = vmatprep.subr.mxu0 0.0
    %1333 = vmatpush1.msra.mxu0 0.0
    %1334 = vmatprep.mubr.f32.mxu0 0.0
    %1335 = vmatmul.mubr.f32.gmra.mrb[0].mxu0 %v1268
    %v1336 = vpop.f32.mrb[0].mxu0
    %v1337 = vadd.f32 %v1051, %v1336
    %v1338 = vpop.f32.mrb[0].mxu0
    %1339 = vdwg.mxu0
    %v1340 = vadd.f32 %v1267, %v1337
    %v1341 = vxor.u32 %v1340, 2147483648
    %v1342 = vmul.f32 %v1341, 1.442695
    %v1343 = vpow.pop %v1342
    %v1344 = vadd.f32 %v1343, 1.0
    %v1345 = vrcp.pop %v1344
    %v1346 = vmul.f32 1.0, %v1345
    %1348 = vrot.lane.b32.xlu0 %v1337, 64
    %v1349 = vpop.permute.xlu0 %1348
    %v1351 = vmul.f32 %v1346, %v1349
    %1353 = vrot.lane.b32.xlu0 %v1351, 64
    %v1354 = vpop.permute.xlu0 %1353
    %v1356 = vadd.f32 %v1267, %v1354
    %v1357 = vtanh.pop %v1356
    %v1358 = vsub.f32 1.0, %v1346
    %1360 = vrot.lane.b32.xlu0 %v1357, 96
    %v1361 = vpop.permute.xlu0 %1360
    %v1363 = vmul.f32 %v1358, %v1361
    %v1364 = vmul.f32 %v1346, %v1259
    %v1365 = vadd.f32 %v1363, %v1364
    %1367 = vrot.lane.b32.xlu0 %v1365, 96
    %v1368 = vpop.permute.xlu0 %1367
    %s1370 = scalar_lea.vmem [#allocation3], 16
    %1371 = vst.msk [vmem:[%s1370] sm:$0xff] %vm512, %v1368
    %s1372 = scalar_lea.vmem [#allocation2], 24
    %v1373 = vld [vmem:[%s1372] sm:$0xff]
    %v1374 = vsel %vm512, %v1368, 0
    %1376 = vmatprep.subr.mxu0 0.0
    %1377 = vmatpush1.msra.mxu0 %v1040
    %1378 = vmatprep.subr.mxu0 0.0
    %1379 = vmatpush1.msra.mxu0 %v1041
    %1380 = vmatprep.subr.mxu0 0.0
    %1381 = vmatpush1.msra.mxu0 %v1042
    %1382 = vmatprep.subr.mxu0 0.0
    %1383 = vmatpush1.msra.mxu0 %v1043
    %1384 = vmatprep.subr.mxu0 0.0
    %1385 = vmatpush1.msra.mxu0 0.0
    %1386 = vmatprep.subr.mxu0 0.0
    %1387 = vmatpush1.msra.mxu0 0.0
    %1388 = vmatprep.subr.mxu0 0.0
    %1389 = vmatpush1.msra.mxu0 0.0
    %1390 = vmatprep.subr.mxu0 0.0
    %1391 = vmatpush1.msra.mxu0 0.0
    %1392 = vmatprep.subr.mxu0 0.0
    %1393 = vmatpush1.msra.mxu0 0.0
    %1394 = vmatprep.subr.mxu0 0.0
    %1395 = vmatpush1.msra.mxu0 0.0
    %1396 = vmatprep.subr.mxu0 0.0
    %1397 = vmatpush1.msra.mxu0 0.0
    %1398 = vmatprep.subr.mxu0 0.0
    %1399 = vmatpush1.msra.mxu0 0.0
    %1400 = vmatprep.subr.mxu0 0.0
    %1401 = vmatpush1.msra.mxu0 0.0
    %1402 = vmatprep.subr.mxu0 0.0
    %1403 = vmatpush1.msra.mxu0 0.0
    %1404 = vmatprep.subr.mxu0 0.0
    %1405 = vmatpush1.msra.mxu0 0.0
    %1406 = vmatprep.subr.mxu0 0.0
    %1407 = vmatpush1.msra.mxu0 0.0
    %1408 = vmatprep.subr.mxu0 0.0
    %1409 = vmatpush1.msra.mxu0 0.0
    %1410 = vmatprep.subr.mxu0 0.0
    %1411 = vmatpush1.msra.mxu0 0.0
    %1412 = vmatprep.subr.mxu0 0.0
    %1413 = vmatpush1.msra.mxu0 0.0
    %1414 = vmatprep.subr.mxu0 0.0
    %1415 = vmatpush1.msra.mxu0 0.0
    %1416 = vmatprep.subr.mxu0 0.0
    %1417 = vmatpush1.msra.mxu0 0.0
    %1418 = vmatprep.subr.mxu0 0.0
    %1419 = vmatpush1.msra.mxu0 0.0
    %1420 = vmatprep.subr.mxu0 0.0
    %1421 = vmatpush1.msra.mxu0 0.0
    %1422 = vmatprep.subr.mxu0 0.0
    %1423 = vmatpush1.msra.mxu0 0.0
    %1424 = vmatprep.subr.mxu0 0.0
    %1425 = vmatpush1.msra.mxu0 0.0
    %1426 = vmatprep.subr.mxu0 0.0
    %1427 = vmatpush1.msra.mxu0 0.0
    %1428 = vmatprep.subr.mxu0 0.0
    %1429 = vmatpush1.msra.mxu0 0.0
    %1430 = vmatprep.subr.mxu0 0.0
    %1431 = vmatpush1.msra.mxu0 0.0
    %1432 = vmatprep.subr.mxu0 0.0
    %1433 = vmatpush1.msra.mxu0 0.0
    %1434 = vmatprep.subr.mxu0 0.0
    %1435 = vmatpush1.msra.mxu0 0.0
    %1436 = vmatprep.subr.mxu0 0.0
    %1437 = vmatpush1.msra.mxu0 0.0
    %1438 = vmatprep.subr.mxu0 0.0
    %1439 = vmatpush1.msra.mxu0 0.0
    %1440 = vmatprep.mubr.f32.mxu0 0.0
    %1441 = vmatmul.mubr.f32.gmra.mrb[0].mxu0 %v1374
    %v1442 = vpop.f32.mrb[0].mxu0
    %v1443 = vadd.f32 %v1051, %v1442
    %v1444 = vpop.f32.mrb[0].mxu0
    %1445 = vdwg.mxu0
    %v1446 = vadd.f32 %v1373, %v1443
    %v1447 = vxor.u32 %v1446, 2147483648
    %v1448 = vmul.f32 %v1447, 1.442695
    %v1449 = vpow.pop %v1448
    %v1450 = vadd.f32 %v1449, 1.0
    %v1451 = vrcp.pop %v1450
    %v1452 = vmul.f32 1.0, %v1451
    %1454 = vrot.lane.b32.xlu0 %v1443, 64
    %v1455 = vpop.permute.xlu0 %1454
    %v1457 = vmul.f32 %v1452, %v1455
    %1459 = vrot.lane.b32.xlu0 %v1457, 64
    %v1460 = vpop.permute.xlu0 %1459
    %v1462 = vadd.f32 %v1373, %v1460
    %v1463 = vtanh.pop %v1462
    %v1464 = vsub.f32 1.0, %v1452
    %1466 = vrot.lane.b32.xlu0 %v1463, 96
    %v1467 = vpop.permute.xlu0 %1466
    %v1469 = vmul.f32 %v1464, %v1467
    %v1470 = vmul.f32 %v1452, %v1365
    %v1471 = vadd.f32 %v1469, %v1470
    %1473 = vrot.lane.b32.xlu0 %v1471, 96
    %v1474 = vpop.permute.xlu0 %1473
    %s1476 = scalar_lea.vmem [#allocation3], 24
    %1477 = vst.msk [vmem:[%s1476] sm:$0xff] %vm512, %v1474
    %s1478 = scalar_lea.vmem [#allocation2], 32
    %v1479 = vld [vmem:[%s1478] sm:$0xff]
    %v1480 = vsel %vm512, %v1474, 0
    %1482 = vmatprep.subr.mxu0 0.0
    %1483 = vmatpush1.msra.mxu0 %v1040
    %1484 = vmatprep.subr.mxu0 0.0
    %1485 = vmatpush1.msra.mxu0 %v1041
    %1486 = vmatprep.subr.mxu0 0.0
    %1487 = vmatpush1.msra.mxu0 %v1042
    %1488 = vmatprep.subr.mxu0 0.0
    %1489 = vmatpush1.msra.mxu0 %v1043
    %1490 = vmatprep.subr.mxu0 0.0
    %1491 = vmatpush1.msra.mxu0 0.0
    %1492 = vmatprep.subr.mxu0 0.0
    %1493 = vmatpush1.msra.mxu0 0.0
    %1494 = vmatprep.subr.mxu0 0.0
    %1495 = vmatpush1.msra.mxu0 0.0
    %1496 = vmatprep.subr.mxu0 0.0
    %1497 = vmatpush1.msra.mxu0 0.0
    %1498 = vmatprep.subr.mxu0 0.0
    %1499 = vmatpush1.msra.mxu0 0.0
    %1500 = vmatprep.subr.mxu0 0.0
    %1501 = vmatpush1.msra.mxu0 0.0
    %1502 = vmatprep.subr.mxu0 0.0
    %1503 = vmatpush1.msra.mxu0 0.0
    %1504 = vmatprep.subr.mxu0 0.0
    %1505 = vmatpush1.msra.mxu0 0.0
    %1506 = vmatprep.subr.mxu0 0.0
    %1507 = vmatpush1.msra.mxu0 0.0
    %1508 = vmatprep.subr.mxu0 0.0
    %1509 = vmatpush1.msra.mxu0 0.0
    %1510 = vmatprep.subr.mxu0 0.0
    %1511 = vmatpush1.msra.mxu0 0.0
    %1512 = vmatprep.subr.mxu0 0.0
    %1513 = vmatpush1.msra.mxu0 0.0
    %1514 = vmatprep.subr.mxu0 0.0
    %1515 = vmatpush1.msra.mxu0 0.0
    %1516 = vmatprep.subr.mxu0 0.0
    %1517 = vmatpush1.msra.mxu0 0.0
    %1518 = vmatprep.subr.mxu0 0.0
    %1519 = vmatpush1.msra.mxu0 0.0
    %1520 = vmatprep.subr.mxu0 0.0
    %1521 = vmatpush1.msra.mxu0 0.0
    %1522 = vmatprep.subr.mxu0 0.0
    %1523 = vmatpush1.msra.mxu0 0.0
    %1524 = vmatprep.subr.mxu0 0.0
    %1525 = vmatpush1.msra.mxu0 0.0
    %1526 = vmatprep.subr.mxu0 0.0
    %1527 = vmatpush1.msra.mxu0 0.0
    %1528 = vmatprep.subr.mxu0 0.0
    %1529 = vmatpush1.msra.mxu0 0.0
    %1530 = vmatprep.subr.mxu0 0.0
    %1531 = vmatpush1.msra.mxu0 0.0
    %1532 = vmatprep.subr.mxu0 0.0
    %1533 = vmatpush1.msra.mxu0 0.0
    %1534 = vmatprep.subr.mxu0 0.0
    %1535 = vmatpush1.msra.mxu0 0.0
    %1536 = vmatprep.subr.mxu0 0.0
    %1537 = vmatpush1.msra.mxu0 0.0
    %1538 = vmatprep.subr.mxu0 0.0
    %1539 = vmatpush1.msra.mxu0 0.0
    %1540 = vmatprep.subr.mxu0 0.0
    %1541 = vmatpush1.msra.mxu0 0.0
    %1542 = vmatprep.subr.mxu0 0.0
    %1543 = vmatpush1.msra.mxu0 0.0
    %1544 = vmatprep.subr.mxu0 0.0
    %1545 = vmatpush1.msra.mxu0 0.0
    %1546 = vmatprep.mubr.f32.mxu0 0.0
    %1547 = vmatmul.mubr.f32.gmra.mrb[0].mxu0 %v1480
    %v1548 = vpop.f32.mrb[0].mxu0
    %v1549 = vadd.f32 %v1051, %v1548
    %v1550 = vpop.f32.mrb[0].mxu0
    %1551 = vdwg.mxu0
    %v1552 = vadd.f32 %v1479, %v1549
    %v1553 = vxor.u32 %v1552, 2147483648
    %v1554 = vmul.f32 %v1553, 1.442695
    %v1555 = vpow.pop %v1554
    %v1556 = vadd.f32 %v1555, 1.0
    %v1557 = vrcp.pop %v1556
    %v1558 = vmul.f32 1.0, %v1557
    %1560 = vrot.lane.b32.xlu0 %v1549, 64
    %v1561 = vpop.permute.xlu0 %1560
    %v1563 = vmul.f32 %v1558, %v1561
    %1565 = vrot.lane.b32.xlu0 %v1563, 64
    %v1566 = vpop.permute.xlu0 %1565
    %v1568 = vadd.f32 %v1479, %v1566
    %v1569 = vtanh.pop %v1568
    %v1570 = vsub.f32 1.0, %v1558
    %1572 = vrot.lane.b32.xlu0 %v1569, 96
    %v1573 = vpop.permute.xlu0 %1572
    %v1575 = vmul.f32 %v1570, %v1573
    %v1576 = vmul.f32 %v1558, %v1471
    %v1577 = vadd.f32 %v1575, %v1576
    %1579 = vrot.lane.b32.xlu0 %v1577, 96
    %v1580 = vpop.permute.xlu0 %1579
    %s1582 = scalar_lea.vmem [#allocation3], 32
    %1583 = vst.msk [vmem:[%s1582] sm:$0xff] %vm512, %v1580
    %s1584 = scalar_lea.vmem [#allocation2], 40
    %v1585 = vld [vmem:[%s1584] sm:$0xff]
    %v1586 = vsel %vm512, %v1580, 0
    %1588 = vmatprep.subr.mxu0 0.0
    %1589 = vmatpush1.msra.mxu0 %v1040
    %1590 = vmatprep.subr.mxu0 0.0
    %1591 = vmatpush1.msra.mxu0 %v1041
    %1592 = vmatprep.subr.mxu0 0.0
    %1593 = vmatpush1.msra.mxu0 %v1042
    %1594 = vmatprep.subr.mxu0 0.0
    %1595 = vmatpush1.msra.mxu0 %v1043
    %1596 = vmatprep.subr.mxu0 0.0
    %1597 = vmatpush1.msra.mxu0 0.0
    %1598 = vmatprep.subr.mxu0 0.0
    %1599 = vmatpush1.msra.mxu0 0.0
    %1600 = vmatprep.subr.mxu0 0.0
    %1601 = vmatpush1.msra.mxu0 0.0
    %1602 = vmatprep.subr.mxu0 0.0
    %1603 = vmatpush1.msra.mxu0 0.0
    %1604 = vmatprep.subr.mxu0 0.0
    %1605 = vmatpush1.msra.mxu0 0.0
    %1606 = vmatprep.subr.mxu0 0.0
    %1607 = vmatpush1.msra.mxu0 0.0
    %1608 = vmatprep.subr.mxu0 0.0
    %1609 = vmatpush1.msra.mxu0 0.0
    %1610 = vmatprep.subr.mxu0 0.0
    %1611 = vmatpush1.msra.mxu0 0.0
    %1612 = vmatprep.subr.mxu0 0.0
    %1613 = vmatpush1.msra.mxu0 0.0
    %1614 = vmatprep.subr.mxu0 0.0
    %1615 = vmatpush1.msra.mxu0 0.0
    %1616 = vmatprep.subr.mxu0 0.0
    %1617 = vmatpush1.msra.mxu0 0.0
    %1618 = vmatprep.subr.mxu0 0.0
    %1619 = vmatpush1.msra.mxu0 0.0
    %1620 = vmatprep.subr.mxu0 0.0
    %1621 = vmatpush1.msra.mxu0 0.0
    %1622 = vmatprep.subr.mxu0 0.0
    %1623 = vmatpush1.msra.mxu0 0.0
    %1624 = vmatprep.subr.mxu0 0.0
    %1625 = vmatpush1.msra.mxu0 0.0
    %1626 = vmatprep.subr.mxu0 0.0
    %1627 = vmatpush1.msra.mxu0 0.0
    %1628 = vmatprep.subr.mxu0 0.0
    %1629 = vmatpush1.msra.mxu0 0.0
    %1630 = vmatprep.subr.mxu0 0.0
    %1631 = vmatpush1.msra.mxu0 0.0
    %1632 = vmatprep.subr.mxu0 0.0
    %1633 = vmatpush1.msra.mxu0 0.0
    %1634 = vmatprep.subr.mxu0 0.0
    %1635 = vmatpush1.msra.mxu0 0.0
    %1636 = vmatprep.subr.mxu0 0.0
    %1637 = vmatpush1.msra.mxu0 0.0
    %1638 = vmatprep.subr.mxu0 0.0
    %1639 = vmatpush1.msra.mxu0 0.0
    %1640 = vmatprep.subr.mxu0 0.0
    %1641 = vmatpush1.msra.mxu0 0.0
    %1642 = vmatprep.subr.mxu0 0.0
    %1643 = vmatpush1.msra.mxu0 0.0
    %1644 = vmatprep.subr.mxu0 0.0
    %1645 = vmatpush1.msra.mxu0 0.0
    %1646 = vmatprep.subr.mxu0 0.0
    %1647 = vmatpush1.msra.mxu0 0.0
    %1648 = vmatprep.subr.mxu0 0.0
    %1649 = vmatpush1.msra.mxu0 0.0
    %1650 = vmatprep.subr.mxu0 0.0
    %1651 = vmatpush1.msra.mxu0 0.0
    %1652 = vmatprep.mubr.f32.mxu0 0.0
    %1653 = vmatmul.mubr.f32.gmra.mrb[0].mxu0 %v1586
    %v1654 = vpop.f32.mrb[0].mxu0
    %v1655 = vadd.f32 %v1051, %v1654
    %v1656 = vpop.f32.mrb[0].mxu0
    %1657 = vdwg.mxu0
    %v1658 = vadd.f32 %v1585, %v1655
    %v1659 = vxor.u32 %v1658, 2147483648
    %v1660 = vmul.f32 %v1659, 1.442695
    %v1661 = vpow.pop %v1660
    %v1662 = vadd.f32 %v1661, 1.0
    %v1663 = vrcp.pop %v1662
    %v1664 = vmul.f32 1.0, %v1663
    %1666 = vrot.lane.b32.xlu0 %v1655, 64
    %v1667 = vpop.permute.xlu0 %1666
    %v1669 = vmul.f32 %v1664, %v1667
    %1671 = vrot.lane.b32.xlu0 %v1669, 64
    %v1672 = vpop.permute.xlu0 %1671
    %v1674 = vadd.f32 %v1585, %v1672
    %v1675 = vtanh.pop %v1674
    %v1676 = vsub.f32 1.0, %v1664
    %1678 = vrot.lane.b32.xlu0 %v1675, 96
    %v1679 = vpop.permute.xlu0 %1678
    %v1681 = vmul.f32 %v1676, %v1679
    %v1682 = vmul.f32 %v1664, %v1577
    %v1683 = vadd.f32 %v1681, %v1682
    %1685 = vrot.lane.b32.xlu0 %v1683, 96
    %v1686 = vpop.permute.xlu0 %1685
    %s1688 = scalar_lea.vmem [#allocation3], 40
    %1689 = vst.msk [vmem:[%s1688] sm:$0xff] %vm512, %v1686
    %s1690 = scalar_lea.vmem [#allocation2], 48
    %v1691 = vld [vmem:[%s1690] sm:$0xff]
    %v1692 = vsel %vm512, %v1686, 0
    %1694 = vmatprep.subr.mxu0 0.0
    %1695 = vmatpush1.msra.mxu0 %v1040
    %1696 = vmatprep.subr.mxu0 0.0
    %1697 = vmatpush1.msra.mxu0 %v1041
    %1698 = vmatprep.subr.mxu0 0.0
    %1699 = vmatpush1.msra.mxu0 %v1042
    %1700 = vmatprep.subr.mxu0 0.0
    %1701 = vmatpush1.msra.mxu0 %v1043
    %1702 = vmatprep.subr.mxu0 0.0
    %1703 = vmatpush1.msra.mxu0 0.0
    %1704 = vmatprep.subr.mxu0 0.0
    %1705 = vmatpush1.msra.mxu0 0.0
    %1706 = vmatprep.subr.mxu0 0.0
    %1707 = vmatpush1.msra.mxu0 0.0
    %1708 = vmatprep.subr.mxu0 0.0
    %1709 = vmatpush1.msra.mxu0 0.0
    %1710 = vmatprep.subr.mxu0 0.0
    %1711 = vmatpush1.msra.mxu0 0.0
    %1712 = vmatprep.subr.mxu0 0.0
    %1713 = vmatpush1.msra.mxu0 0.0
    %1714 = vmatprep.subr.mxu0 0.0
    %1715 = vmatpush1.msra.mxu0 0.0
    %1716 = vmatprep.subr.mxu0 0.0
    %1717 = vmatpush1.msra.mxu0 0.0
    %1718 = vmatprep.subr.mxu0 0.0
    %1719 = vmatpush1.msra.mxu0 0.0
    %1720 = vmatprep.subr.mxu0 0.0
    %1721 = vmatpush1.msra.mxu0 0.0
    %1722 = vmatprep.subr.mxu0 0.0
    %1723 = vmatpush1.msra.mxu0 0.0
    %1724 = vmatprep.subr.mxu0 0.0
    %1725 = vmatpush1.msra.mxu0 0.0
    %1726 = vmatprep.subr.mxu0 0.0
    %1727 = vmatpush1.msra.mxu0 0.0
    %1728 = vmatprep.subr.mxu0 0.0
    %1729 = vmatpush1.msra.mxu0 0.0
    %1730 = vmatprep.subr.mxu0 0.0
    %1731 = vmatpush1.msra.mxu0 0.0
    %1732 = vmatprep.subr.mxu0 0.0
    %1733 = vmatpush1.msra.mxu0 0.0
    %1734 = vmatprep.subr.mxu0 0.0
    %1735 = vmatpush1.msra.mxu0 0.0
    %1736 = vmatprep.subr.mxu0 0.0
    %1737 = vmatpush1.msra.mxu0 0.0
    %1738 = vmatprep.subr.mxu0 0.0
    %1739 = vmatpush1.msra.mxu0 0.0
    %1740 = vmatprep.subr.mxu0 0.0
    %1741 = vmatpush1.msra.mxu0 0.0
    %1742 = vmatprep.subr.mxu0 0.0
    %1743 = vmatpush1.msra.mxu0 0.0
    %1744 = vmatprep.subr.mxu0 0.0
    %1745 = vmatpush1.msra.mxu0 0.0
    %1746 = vmatprep.subr.mxu0 0.0
    %1747 = vmatpush1.msra.mxu0 0.0
    %1748 = vmatprep.subr.mxu0 0.0
    %1749 = vmatpush1.msra.mxu0 0.0
    %1750 = vmatprep.subr.mxu0 0.0
    %1751 = vmatpush1.msra.mxu0 0.0
    %1752 = vmatprep.subr.mxu0 0.0
    %1753 = vmatpush1.msra.mxu0 0.0
    %1754 = vmatprep.subr.mxu0 0.0
    %1755 = vmatpush1.msra.mxu0 0.0
    %1756 = vmatprep.subr.mxu0 0.0
    %1757 = vmatpush1.msra.mxu0 0.0
    %1758 = vmatprep.mubr.f32.mxu0 0.0
    %1759 = vmatmul.mubr.f32.gmra.mrb[0].mxu0 %v1692
    %v1760 = vpop.f32.mrb[0].mxu0
    %v1761 = vadd.f32 %v1051, %v1760
    %v1762 = vpop.f32.mrb[0].mxu0
    %1763 = vdwg.mxu0
    %v1764 = vadd.f32 %v1691, %v1761
    %v1765 = vxor.u32 %v1764, 2147483648
    %v1766 = vmul.f32 %v1765, 1.442695
    %v1767 = vpow.pop %v1766
    %v1768 = vadd.f32 %v1767, 1.0
    %v1769 = vrcp.pop %v1768
    %v1770 = vmul.f32 1.0, %v1769
    %1772 = vrot.lane.b32.xlu0 %v1761, 64
    %v1773 = vpop.permute.xlu0 %1772
    %v1775 = vmul.f32 %v1770, %v1773
    %1777 = vrot.lane.b32.xlu0 %v1775, 64
    %v1778 = vpop.permute.xlu0 %1777
    %v1780 = vadd.f32 %v1691, %v1778
    %v1781 = vtanh.pop %v1780
    %v1782 = vsub.f32 1.0, %v1770
    %1784 = vrot.lane.b32.xlu0 %v1781, 96
    %v1785 = vpop.permute.xlu0 %1784
    %v1787 = vmul.f32 %v1782, %v1785
    %v1788 = vmul.f32 %v1770, %v1683
    %v1789 = vadd.f32 %v1787, %v1788
    %1791 = vrot.lane.b32.xlu0 %v1789, 96
    %v1792 = vpop.permute.xlu0 %1791
    %s1794 = scalar_lea.vmem [#allocation3], 48
    %1795 = vst.msk [vmem:[%s1794] sm:$0xff] %vm512, %v1792
    %s1796 = scalar_lea.vmem [#allocation2], 56
    %v1797 = vld [vmem:[%s1796] sm:$0xff]
    %v1798 = vsel %vm512, %v1792, 0
    %1800 = vmatprep.subr.mxu0 0.0
    %1801 = vmatpush1.msra.mxu0 %v1040
    %1802 = vmatprep.subr.mxu0 0.0
    %1803 = vmatpush1.msra.mxu0 %v1041
    %1804 = vmatprep.subr.mxu0 0.0
    %1805 = vmatpush1.msra.mxu0 %v1042
    %1806 = vmatprep.subr.mxu0 0.0
    %1807 = vmatpush1.msra.mxu0 %v1043
    %1808 = vmatprep.subr.mxu0 0.0
    %1809 = vmatpush1.msra.mxu0 0.0
    %1810 = vmatprep.subr.mxu0 0.0
    %1811 = vmatpush1.msra.mxu0 0.0
    %1812 = vmatprep.subr.mxu0 0.0
    %1813 = vmatpush1.msra.mxu0 0.0
    %1814 = vmatprep.subr.mxu0 0.0
    %1815 = vmatpush1.msra.mxu0 0.0
    %1816 = vmatprep.subr.mxu0 0.0
    %1817 = vmatpush1.msra.mxu0 0.0
    %1818 = vmatprep.subr.mxu0 0.0
    %1819 = vmatpush1.msra.mxu0 0.0
    %1820 = vmatprep.subr.mxu0 0.0
    %1821 = vmatpush1.msra.mxu0 0.0
    %1822 = vmatprep.subr.mxu0 0.0
    %1823 = vmatpush1.msra.mxu0 0.0
    %1824 = vmatprep.subr.mxu0 0.0
    %1825 = vmatpush1.msra.mxu0 0.0
    %1826 = vmatprep.subr.mxu0 0.0
    %1827 = vmatpush1.msra.mxu0 0.0
    %1828 = vmatprep.subr.mxu0 0.0
    %1829 = vmatpush1.msra.mxu0 0.0
    %1830 = vmatprep.subr.mxu0 0.0
    %1831 = vmatpush1.msra.mxu0 0.0
    %1832 = vmatprep.subr.mxu0 0.0
    %1833 = vmatpush1.msra.mxu0 0.0
    %1834 = vmatprep.subr.mxu0 0.0
    %1835 = vmatpush1.msra.mxu0 0.0
    %1836 = vmatprep.subr.mxu0 0.0
    %1837 = vmatpush1.msra.mxu0 0.0
    %1838 = vmatprep.subr.mxu0 0.0
    %1839 = vmatpush1.msra.mxu0 0.0
    %1840 = vmatprep.subr.mxu0 0.0
    %1841 = vmatpush1.msra.mxu0 0.0
    %1842 = vmatprep.subr.mxu0 0.0
    %1843 = vmatpush1.msra.mxu0 0.0
    %1844 = vmatprep.subr.mxu0 0.0
    %1845 = vmatpush1.msra.mxu0 0.0
    %1846 = vmatprep.subr.mxu0 0.0
    %1847 = vmatpush1.msra.mxu0 0.0
    %1848 = vmatprep.subr.mxu0 0.0
    %1849 = vmatpush1.msra.mxu0 0.0
    %1850 = vmatprep.subr.mxu0 0.0
    %1851 = vmatpush1.msra.mxu0 0.0
    %1852 = vmatprep.subr.mxu0 0.0
    %1853 = vmatpush1.msra.mxu0 0.0
    %1854 = vmatprep.subr.mxu0 0.0
    %1855 = vmatpush1.msra.mxu0 0.0
    %1856 = vmatprep.subr.mxu0 0.0
    %1857 = vmatpush1.msra.mxu0 0.0
    %1858 = vmatprep.subr.mxu0 0.0
    %1859 = vmatpush1.msra.mxu0 0.0
    %1860 = vmatprep.subr.mxu0 0.0
    %1861 = vmatpush1.msra.mxu0 0.0
    %1862 = vmatprep.subr.mxu0 0.0
    %1863 = vmatpush1.msra.mxu0 0.0
    %1864 = vmatprep.mubr.f32.mxu0 0.0
    %1865 = vmatmul.mubr.f32.gmra.mrb[0].mxu0 %v1798
    %v1866 = vpop.f32.mrb[0].mxu0
    %v1867 = vadd.f32 %v1051, %v1866
    %v1868 = vpop.f32.mrb[0].mxu0
    %1869 = vdwg.mxu0
    %v1870 = vadd.f32 %v1797, %v1867
    %v1871 = vxor.u32 %v1870, 2147483648
    %v1872 = vmul.f32 %v1871, 1.442695
    %v1873 = vpow.pop %v1872
    %v1874 = vadd.f32 %v1873, 1.0
    %v1875 = vrcp.pop %v1874
    %v1876 = vmul.f32 1.0, %v1875
    %1878 = vrot.lane.b32.xlu0 %v1867, 64
    %v1879 = vpop.permute.xlu0 %1878
    %v1881 = vmul.f32 %v1876, %v1879
    %1883 = vrot.lane.b32.xlu0 %v1881, 64
    %v1884 = vpop.permute.xlu0 %1883
    %v1886 = vadd.f32 %v1797, %v1884
    %v1887 = vtanh.pop %v1886
    %v1888 = vsub.f32 1.0, %v1876
    %1890 = vrot.lane.b32.xlu0 %v1887, 96
    %v1891 = vpop.permute.xlu0 %1890
    %v1893 = vmul.f32 %v1888, %v1891
    %v1894 = vmul.f32 %v1876, %v1789
    %v1895 = vadd.f32 %v1893, %v1894
    %1897 = vrot.lane.b32.xlu0 %v1895, 96
    %v1898 = vpop.permute.xlu0 %1897
    %s1900 = scalar_lea.vmem [#allocation3], 56
    %1901 = vst.msk [vmem:[%s1900] sm:$0xff] %vm512, %v1898
    %1902 = vst.msk [vmem:[#allocation6] sm:$0xff] %vm512, %v1898
    %v1903 = vld [vmem:[#allocation3] sm:$0xff]
    %v1904 = vld [vmem:[#allocation3 + $0x8] sm:$0xff]
    %v1905 = vld [vmem:[#allocation3 + $0x10] sm:$0xff]
    %v1906 = vld [vmem:[#allocation3 + $0x18] sm:$0xff]
    %v1907 = vld [vmem:[#allocation3 + $0x20] sm:$0xff]
    %v1908 = vld [vmem:[#allocation3 + $0x28] sm:$0xff]
    %v1909 = vld [vmem:[#allocation3 + $0x30] sm:$0xff]
    %v1910 = vld [vmem:[#allocation3 + $0x38] sm:$0xff]
    %v1911 = vld [vmem:[%s10] sm:$0xff]
    %v1912 = vld [vmem:[%s10 + $0x8] sm:$0xff]
    %v1913 = vld [vmem:[%s10 + $0x10] sm:$0xff]
    %v1914 = vld [vmem:[%s10 + $0x18] sm:$0xff]
    %v1915 = vld [vmem:[%s11] sm:$0x1]
    %v1917 = vlaneseq
    %v1918 = vshrl.u32 %v1917, 7
    %v1919 = vsub.s32 0, %v1918
    %v1920 = vrot.slane %v1915, %v1919
    %v1923 = vsel %vm512, %v1903, 0
    %v1926 = vsel %vm512, %v1904, 0
    %v1929 = vsel %vm512, %v1905, 0
    %v1932 = vsel %vm512, %v1906, 0
    %v1935 = vsel %vm512, %v1907, 0
    %v1938 = vsel %vm512, %v1908, 0
    %v1941 = vsel %vm512, %v1909, 0
    %v1944 = vsel %vm512, %v1910, 0
    %1946 = vmatprep.subr.mxu0 0.0
    %1947 = vmatpush1.msra.mxu0 %v1911
    %1948 = vmatprep.subr.mxu0 0.0
    %1949 = vmatpush1.msra.mxu0 %v1912
    %1950 = vmatprep.subr.mxu0 0.0
    %1951 = vmatpush1.msra.mxu0 %v1913
    %1952 = vmatprep.subr.mxu0 0.0
    %1953 = vmatpush1.msra.mxu0 %v1914
    %1954 = vmatprep.subr.mxu0 0.0
    %1955 = vmatpush1.msra.mxu0 0.0
    %1956 = vmatprep.subr.mxu0 0.0
    %1957 = vmatpush1.msra.mxu0 0.0
    %1958 = vmatprep.subr.mxu0 0.0
    %1959 = vmatpush1.msra.mxu0 0.0
    %1960 = vmatprep.subr.mxu0 0.0
    %1961 = vmatpush1.msra.mxu0 0.0
    %1962 = vmatprep.subr.mxu0 0.0
    %1963 = vmatpush1.msra.mxu0 0.0
    %1964 = vmatprep.subr.mxu0 0.0
    %1965 = vmatpush1.msra.mxu0 0.0
    %1966 = vmatprep.subr.mxu0 0.0
    %1967 = vmatpush1.msra.mxu0 0.0
    %1968 = vmatprep.subr.mxu0 0.0
    %1969 = vmatpush1.msra.mxu0 0.0
    %1970 = vmatprep.subr.mxu0 0.0
    %1971 = vmatpush1.msra.mxu0 0.0
    %1972 = vmatprep.subr.mxu0 0.0
    %1973 = vmatpush1.msra.mxu0 0.0
    %1974 = vmatprep.subr.mxu0 0.0
    %1975 = vmatpush1.msra.mxu0 0.0
    %1976 = vmatprep.subr.mxu0 0.0
    %1977 = vmatpush1.msra.mxu0 0.0
    %1978 = vmatprep.subr.mxu0 0.0
    %1979 = vmatpush1.msra.mxu0 0.0
    %1980 = vmatprep.subr.mxu0 0.0
    %1981 = vmatpush1.msra.mxu0 0.0
    %1982 = vmatprep.subr.mxu0 0.0
    %1983 = vmatpush1.msra.mxu0 0.0
    %1984 = vmatprep.subr.mxu0 0.0
    %1985 = vmatpush1.msra.mxu0 0.0
    %1986 = vmatprep.subr.mxu0 0.0
    %1987 = vmatpush1.msra.mxu0 0.0
    %1988 = vmatprep.subr.mxu0 0.0
    %1989 = vmatpush1.msra.mxu0 0.0
    %1990 = vmatprep.subr.mxu0 0.0
    %1991 = vmatpush1.msra.mxu0 0.0
    %1992 = vmatprep.subr.mxu0 0.0
    %1993 = vmatpush1.msra.mxu0 0.0
    %1994 = vmatprep.subr.mxu0 0.0
    %1995 = vmatpush1.msra.mxu0 0.0
    %1996 = vmatprep.subr.mxu0 0.0
    %1997 = vmatpush1.msra.mxu0 0.0
    %1998 = vmatprep.subr.mxu0 0.0
    %1999 = vmatpush1.msra.mxu0 0.0
    %2000 = vmatprep.subr.mxu0 0.0
    %2001 = vmatpush1.msra.mxu0 0.0
    %2002 = vmatprep.subr.mxu0 0.0
    %2003 = vmatpush1.msra.mxu0 0.0
    %2004 = vmatprep.subr.mxu0 0.0
    %2005 = vmatpush1.msra.mxu0 0.0
    %2006 = vmatprep.subr.mxu0 0.0
    %2007 = vmatpush1.msra.mxu0 0.0
    %2008 = vmatprep.subr.mxu0 0.0
    %2009 = vmatpush1.msra.mxu0 0.0
    %2010 = vmatprep.mubr.f32.mxu0 0.0
    %2011 = vmatmul.mubr.f32.gmra.mrb[0].mxu0 %v1923
    %v2012 = vpop.f32.mrb[0].mxu0
    %v2013 = vadd.f32 %v1920, %v2012
    %v2014 = vpop.f32.mrb[0].mxu0
    %2015 = vmatprep.mubr.f32.mxu0 0.0
    %2016 = vmatmul.mubr.f32.gmra.mrb[0].mxu0 %v1926
    %v2017 = vpop.f32.mrb[0].mxu0
    %v2018 = vadd.f32 %v1920, %v2017
    %v2019 = vpop.f32.mrb[0].mxu0
    %2020 = vmatprep.mubr.f32.mxu0 0.0
    %2021 = vmatmul.mubr.f32.gmra.mrb[0].mxu0 %v1929
    %v2022 = vpop.f32.mrb[0].mxu0
    %v2023 = vadd.f32 %v1920, %v2022
    %v2024 = vpop.f32.mrb[0].mxu0
    %2025 = vmatprep.mubr.f32.mxu0 0.0
    %2026 = vmatmul.mubr.f32.gmra.mrb[0].mxu0 %v1932
    %v2027 = vpop.f32.mrb[0].mxu0
    %v2028 = vadd.f32 %v1920, %v2027
    %v2029 = vpop.f32.mrb[0].mxu0
    %2030 = vmatprep.mubr.f32.mxu0 0.0
    %2031 = vmatmul.mubr.f32.gmra.mrb[0].mxu0 %v1935
    %v2032 = vpop.f32.mrb[0].mxu0
    %v2033 = vadd.f32 %v1920, %v2032
    %v2034 = vpop.f32.mrb[0].mxu0
    %2035 = vmatprep.mubr.f32.mxu0 0.0
    %2036 = vmatmul.mubr.f32.gmra.mrb[0].mxu0 %v1938
    %v2037 = vpop.f32.mrb[0].mxu0
    %v2038 = vadd.f32 %v1920, %v2037
    %v2039 = vpop.f32.mrb[0].mxu0
    %2040 = vmatprep.mubr.f32.mxu0 0.0
    %2041 = vmatmul.mubr.f32.gmra.mrb[0].mxu0 %v1941
    %v2042 = vpop.f32.mrb[0].mxu0
    %v2043 = vadd.f32 %v1920, %v2042
    %v2044 = vpop.f32.mrb[0].mxu0
    %2045 = vmatprep.mubr.f32.mxu0 0.0
    %2046 = vmatmul.mubr.f32.gmra.mrb[0].mxu0 %v1944
    %v2047 = vpop.f32.mrb[0].mxu0
    %v2048 = vadd.f32 %v1920, %v2047
    %v2049 = vpop.f32.mrb[0].mxu0
    %2050 = vdwg.mxu0
    %2051 = vmax.xlane.f32.xlu0 %v2013
    %v2052 = vpop.xlane.xlu0 %2051
    %2053 = vmax.xlane.f32.xlu0 %v2018
    %v2054 = vpop.xlane.xlu0 %2053
    %2055 = vmax.xlane.f32.xlu0 %v2023
    %v2056 = vpop.xlane.xlu0 %2055
    %2057 = vmax.xlane.f32.xlu0 %v2028
    %v2058 = vpop.xlane.xlu0 %2057
    %2059 = vmax.xlane.f32.xlu0 %v2033
    %v2060 = vpop.xlane.xlu0 %2059
    %2061 = vmax.xlane.f32.xlu0 %v2038
    %v2062 = vpop.xlane.xlu0 %2061
    %2063 = vmax.xlane.f32.xlu0 %v2043
    %v2064 = vpop.xlane.xlu0 %2063
    %2065 = vmax.xlane.f32.xlu0 %v2048
    %v2066 = vpop.xlane.xlu0 %2065
    %v2067 = vsub.f32 %v2013, %v2052
    %v2068 = vsub.f32 %v2018, %v2054
    %v2069 = vsub.f32 %v2023, %v2056
    %v2070 = vsub.f32 %v2028, %v2058
    %v2071 = vsub.f32 %v2033, %v2060
    %v2072 = vsub.f32 %v2038, %v2062
    %v2073 = vsub.f32 %v2043, %v2064
    %v2074 = vsub.f32 %v2048, %v2066
    %v2075 = vmul.f32 %v2067, 1.442695
    %v2076 = vpow.pop %v2075
    %v2077 = vmul.f32 %v2068, 1.442695
    %v2078 = vpow.pop %v2077
    %v2079 = vmul.f32 %v2069, 1.442695
    %v2080 = vpow.pop %v2079
    %v2081 = vmul.f32 %v2070, 1.442695
    %v2082 = vpow.pop %v2081
    %v2083 = vmul.f32 %v2071, 1.442695
    %v2084 = vpow.pop %v2083
    %v2085 = vmul.f32 %v2072, 1.442695
    %v2086 = vpow.pop %v2085
    %v2087 = vmul.f32 %v2073, 1.442695
    %v2088 = vpow.pop %v2087
    %v2089 = vmul.f32 %v2074, 1.442695
    %v2090 = vpow.pop %v2089
    %2091 = vadd.xlane.f32.xlu0 %v2076
    %v2092 = vpop.xlane.xlu0 %2091
    %2093 = vadd.xlane.f32.xlu0 %v2078
    %v2094 = vpop.xlane.xlu0 %2093
    %2095 = vadd.xlane.f32.xlu0 %v2080
    %v2096 = vpop.xlane.xlu0 %2095
    %2097 = vadd.xlane.f32.xlu0 %v2082
    %v2098 = vpop.xlane.xlu0 %2097
    %2099 = vadd.xlane.f32.xlu0 %v2084
    %v2100 = vpop.xlane.xlu0 %2099
    %2101 = vadd.xlane.f32.xlu0 %v2086
    %v2102 = vpop.xlane.xlu0 %2101
    %2103 = vadd.xlane.f32.xlu0 %v2088
    %v2104 = vpop.xlane.xlu0 %2103
    %2105 = vadd.xlane.f32.xlu0 %v2090
    %v2106 = vpop.xlane.xlu0 %2105
    %v2107 = vlog2.pop %v2092
    %v2108 = vmul.f32 %v2107, 0.6931472
    %v2109 = vlog2.pop %v2094
    %v2110 = vmul.f32 %v2109, 0.6931472
    %v2111 = vlog2.pop %v2096
    %v2112 = vmul.f32 %v2111, 0.6931472
    %v2113 = vlog2.pop %v2098
    %v2114 = vmul.f32 %v2113, 0.6931472
    %v2115 = vlog2.pop %v2100
    %v2116 = vmul.f32 %v2115, 0.6931472
    %v2117 = vlog2.pop %v2102
    %v2118 = vmul.f32 %v2117, 0.6931472
    %v2119 = vlog2.pop %v2104
    %v2120 = vmul.f32 %v2119, 0.6931472
    %v2121 = vlog2.pop %v2106
    %v2122 = vmul.f32 %v2121, 0.6931472
    %v2123 = vadd.f32 %v2108, %v2052
    %v2124 = vadd.f32 %v2110, %v2054
    %v2125 = vadd.f32 %v2112, %v2056
    %v2126 = vadd.f32 %v2114, %v2058
    %v2127 = vadd.f32 %v2116, %v2060
    %v2128 = vadd.f32 %v2118, %v2062
    %v2129 = vadd.f32 %v2120, %v2064
    %v2130 = vadd.f32 %v2122, %v2066
    %v2131 = vsub.f32 %v2013, %v2123
    %v2132 = vsub.f32 %v2018, %v2124
    %v2133 = vsub.f32 %v2023, %v2125
    %v2134 = vsub.f32 %v2028, %v2126
    %v2135 = vsub.f32 %v2033, %v2127
    %v2136 = vsub.f32 %v2038, %v2128
    %v2137 = vsub.f32 %v2043, %v2129
    %v2138 = vsub.f32 %v2048, %v2130
    %2139 = vst [vmem:[#allocation4] sm:$0xff] %v2131
    %2140 = vst [vmem:[#allocation4 + $0x8] sm:$0xff] %v2132
    %2141 = vst [vmem:[#allocation4 + $0x10] sm:$0xff] %v2133
    %2142 = vst [vmem:[#allocation4 + $0x18] sm:$0xff] %v2134
    %2143 = vst [vmem:[#allocation4 + $0x20] sm:$0xff] %v2135
    %2144 = vst [vmem:[#allocation4 + $0x28] sm:$0xff] %v2136
    %2145 = vst [vmem:[#allocation4 + $0x30] sm:$0xff] %v2137
    %2146 = vst [vmem:[#allocation4 + $0x38] sm:$0xff] %v2138
    // Predicated region
    $region50: #{tpu_custom_call.1} parent=1 // pred_check
      _
    $region51: #{tpu_custom_call.1} parent=1 // pred_check_branch
      %2148 = sbr.rel (0) target = $region53
    $region52: #{tpu_custom_call.1} parent=1 // pred_region
      %s2150 = ssub.s32 1024, 1024
      %2151 = vsyncadd [#allocation5], %s2150
      %s2152 = sshll.u32 [#allocation4], 4
      %s2153 = int_to_ptr.vmem [resolvable:$true] %s2152
      %2158 = dma.vmem_to_hbm [thread:$0]  %s2153, 1024, %s12, [#allocation5], 128, 128, 8
    $region53: #{tpu_custom_call.1} parent=1 // pred_fallthru
      _
    // Predicated region
    $region54: #{tpu_custom_call.1} parent=1 // pred_check
      _
    $region55: #{tpu_custom_call.1} parent=1 // pred_check_branch
      %2160 = sbr.rel (0) target = $region57
    $region56: #{tpu_custom_call.1} parent=1 // pred_region
      %s2162 = ssub.s32 128, 128
      %2163 = vsyncadd [#allocation7], %s2162
      %s2165 = sshll.u32 [#allocation6], 4
      %s2166 = int_to_ptr.vmem [resolvable:$true] %s2165
      %2168 = dma.vmem_to_hbm [thread:$0]  %s2166, 128, %s13, [#allocation7]
    $region57: #{tpu_custom_call.1} parent=1 // pred_fallthru
      _
    // Predicated region
    $region58: #{tpu_custom_call.1} parent=1 // pred_check
      _
    $region59: #{tpu_custom_call.1} parent=1 // pred_check_branch
      %2170 = sbr.rel (0) target = $region61
    $region60: #{tpu_custom_call.1} parent=1 // pred_region
      %2171 = dma.done [#allocation5], 1024
    $region61: #{tpu_custom_call.1} parent=1 // pred_fallthru
      _
    // Predicated region
    $region62: #{tpu_custom_call.1} parent=1 // pred_check
      _
    $region63: #{tpu_custom_call.1} parent=1 // pred_check_branch
      %2173 = sbr.rel (0) target = $region65
    $region64: #{tpu_custom_call.1} parent=1 // pred_region
      %2174 = dma.done [#allocation7], 128
    $region65: #{tpu_custom_call.1} parent=1 // pred_fallthru
      _
    %2175 = vsyncpa [#allocation5], 1
    %2176 = vsyncpa [#allocation7], 1

</llo_original>
